<compile_context>
chip_gen: v5e
topology: v5e:2x2
jax: 0.10.0
libtpu: 0.0.40
codegen_flags: <defaults>
</compile_context>

<pallas_src>
from functools import partial

import jax
import jax.numpy as jnp
from jax.experimental import pallas as pl
from jax.experimental.pallas import tpu as pltpu

EOS_TOKEN_ID = 2
PAD_TOKEN_ID = 0


# ----------------------------------------------------------------------------
# Pallas kernel: grid (B, P, n_s, n_v); one (1, TS, TV) log-prob tile per step.
# ----------------------------------------------------------------------------
def _loss_kernel(pred_ref, tgt_ref, tok_ref, nll_ref, cnt_ref, eos_ref,
                 m_sc, am_sc, *,
                 eos_id, pad_id, vocab, tv, n_v, eos_tile, eos_lane):
    s_idx = pl.program_id(2)
    v_idx = pl.program_id(3)

    # Per-(batch, P-chunk) scalar accumulators: init on the first (s, v) step.
    @pl.when(jnp.logical_and(s_idx == 0, v_idx == 0))
    def _init_acc():
        nll_ref[...] = jnp.zeros_like(nll_ref)
        cnt_ref[...] = jnp.zeros_like(cnt_ref)
        eos_ref[...] = jnp.zeros_like(eos_ref)

    # Per-(b, p, s) running vocab-scan state: reset on the first vocab tile.
    @pl.when(v_idx == 0)
    def _init_scan():
        m_sc[...] = jnp.full(m_sc.shape, -jnp.inf, dtype=m_sc.dtype)
        am_sc[...] = jnp.zeros(am_sc.shape, dtype=am_sc.dtype)

    pred = pred_ref[...]                              # (1, TS, TV), native dtype
    tgt = tgt_ref[...]                                # (1, TS, 1)  int32
    ts = pred.shape[1]

    lane = jax.lax.broadcasted_iota(jnp.int32, pred.shape, 2)
    g_idx = lane if n_v == 1 else lane + v_idx * tv   # global vocab index per lane

    # Mask out-of-range lanes of a partial trailing vocab tile (max/argmax only;
    # the gather compare below can never hit lanes >= vocab since tgt < vocab).
    if n_v * tv != vocab:
        pred_mx = jnp.where(g_idx < vocab, pred,
                            jnp.array(-jnp.inf, dtype=pred.dtype))
    else:
        pred_mx = pred

    # ---- NLL gather at target: exactly one hit per row -> exact in bf16 ----
    gathered = jnp.sum(jnp.where(g_idx == tgt, pred, jnp.zeros((), pred.dtype)),
                       axis=-1, keepdims=True).astype(jnp.float32)   # (1, TS, 1)
    nonpad = (tgt != pad_id).astype(jnp.float32)                     # (1, TS, 1)
    nll_ref[...] += jnp.sum(-gathered * nonpad, keepdims=True)       # (1, 1, 1)

    @pl.when(v_idx == 0)
    def _count():
        cnt_ref[...] += jnp.sum(nonpad, keepdims=True)

    # ---- running max / argmax across vocab tiles (first max wins on ties) ----
    # TODO(synk): try a fused jnp.argmax (value+index reduce) to drop one XLU
    # pass once confirmed supported by Mosaic on all targets.
    loc_max = jnp.max(pred_mx, axis=-1, keepdims=True)               # (1, TS, 1)
    loc_arg = jnp.min(jnp.where(pred_mx == loc_max, g_idx, vocab),
                      axis=-1, keepdims=True)                        # (1, TS, 1) i32
    loc_max = loc_max.astype(jnp.float32)
    take_new = loc_max > m_sc[...]
    am_sc[...] = jnp.where(take_new, loc_arg, am_sc[...])
    m_sc[...] = jnp.maximum(m_sc[...], loc_max)

    @pl.when(v_idx == n_v - 1)
    def _store_tokens():
        tok_ref[...] = am_sc[...].reshape(1, 1, ts)                  # lane-dense store

    # ---- EOS term: predictions are normalized log-probs (module precondition),
    #      so softmax(pred)[..., eos] == exp(pred[..., eos]); no LSE recompute.
    #      NOTE: mask intentionally does NOT exclude PAD (matches PyTorch ref).
    @pl.when(v_idx == eos_tile)
    def _eos():
        eos_logp = pred[:, :, eos_lane:eos_lane + 1].astype(jnp.float32)
        eos_mask = (tgt == eos_id).astype(jnp.float32)
        eos_ref[...] += jnp.sum(eos_mask * jnp.log(jnp.exp(eos_logp) + 1e-8),
                                keepdims=True)


# ----------------------------------------------------------------------------
# Tiling / VMEM sizing helpers
# ----------------------------------------------------------------------------
def _vmem_budget_and_cap():
    phys = 64 * 1024 * 1024                 # conservative default (v7x per-TC VMEM)
    try:
        info = pltpu.get_tpu_info()
        phys = int(getattr(info, "vmem_capacity_bytes", phys)) or phys
    except Exception:
        pass
    budget = (8 << 20) if phys >= (96 << 20) else (4 << 20)
    return budget, (phys * 3) // 4


def _choose_tiles(S, V, itemsize, budget):
    """Pick (TS, TV): TS a 128-multiple divisor of S (else the full S) sized so a
    (TS, 128) slab fits the budget; TV = V if a (TS, V) tile fits, else the
    largest 128-multiple under budget (partial trailing vocab tile is masked
    in-kernel)."""
    ts_cap = max(128, budget // max(1, 128 * itemsize))
    ts = S                                   # full-S tile: block dim == array dim
    for cand in (1024, 512, 384, 256, 128):
        if cand <= S and S % cand == 0 and cand <= ts_cap:
            ts = cand
            break
    # TODO(synk): sequences whose length has no 128-multiple divisor use one
    # full-S tile (no row masking for partial S tiles); fine for typical S.
    if V <= 128 or ts * V * itemsize <= budget:
        tv = V
    else:
        tv = max(128, ((budget // (ts * itemsize)) // 128) * 128)
        tv = min(tv, ((V + 127) // 128) * 128)
    return ts, tv


def _pallas_loss_parts(predictions, targets, tile_budget_bytes=None):
    """Returns (pred_tokens (B,S) i32, nll_sum (B,), nonpad_cnt (B,), eos_sum (B,))."""
    B, S, V = predictions.shape
    itemsize = jnp.dtype(predictions.dtype).itemsize
    budget, vmem_cap = _vmem_budget_and_cap()
    if tile_budget_bytes is not None:
        budget = int(tile_budget_bytes)
    TS, TV = _choose_tiles(S, V, itemsize, budget)
    n_s = S // TS
    n_v = pl.cdiv(V, TV)
    # Keep both v7x TensorCores busy when B is odd: split the S reduction across
    # an extra size-2 parallel axis and merge the partial sums in the wrapper.
    P = 2 if (B % 2 == 1 and n_s % 2 == 0 and n_s >= 2) else 1
    n_sp = n_s // P

    kernel = partial(
        _loss_kernel, eos_id=EOS_TOKEN_ID, pad_id=PAD_TOKEN_ID,
        vocab=V, tv=TV, n_v=n_v,
        eos_tile=EOS_TOKEN_ID // TV, eos_lane=EOS_TOKEN_ID % TV)

    pred_spec = pl.BlockSpec((1, TS, TV), lambda b, p, s, v: (b, p * n_sp + s, v))
    tgt_spec = pl.BlockSpec((1, TS, 1), lambda b, p, s, v: (b, p * n_sp + s, 0))
    tok_spec = pl.BlockSpec((1, 1, TS), lambda b, p, s, v: (b, 0, p * n_sp + s))
    acc_spec = pl.BlockSpec((1, 1, 1), lambda b, p, s, v: (b * P + p, 0, 0))

    out_shapes = (
        jax.ShapeDtypeStruct((B, 1, S), jnp.int32),        # argmax tokens (lane-dense)
        jax.ShapeDtypeStruct((B * P, 1, 1), jnp.float32),  # sum -log p at non-pad targets
        jax.ShapeDtypeStruct((B * P, 1, 1), jnp.float32),  # non-pad count
        jax.ShapeDtypeStruct((B * P, 1, 1), jnp.float32),  # sum eos_mask*log(p_eos + eps)
    )

    # VMEM limit derived from the real (double-buffered) footprint with margin,
    # capped at 3/4 of physical VMEM (48 MiB on v7x, 96 MiB on v5e/v6e).
    pred_tile = TS * TV * itemsize
    tgt_tile = TS * 128 * 4                 # (1,TS,1) int32 pads lanes to 128
    tok_tile = 8 * max(TS, 128) * 4         # (1,1,TS) int32 pads sublanes to 8
    scratch = 2 * TS * 128 * 4              # running max (f32) + argmax (i32)
    footprint = 2 * (pred_tile + tgt_tile) + 2 * tok_tile + scratch
    vmem_limit = int(min(vmem_cap, max(32 << 20, 2 * footprint + (4 << 20))))

    cost = pl.CostEstimate(
        flops=int(7 * B * S * V),
        transcendentals=int(2 * B * S),
        bytes_accessed=int(B * S * V * itemsize + 3 * B * S * 4),
    )

    tok, nll, cnt, eos = pl.pallas_call(
        kernel,
        out_shape=out_shapes,
        grid=(B, P, n_sp, n_v),
        in_specs=[pred_spec, tgt_spec],
        out_specs=(tok_spec, acc_spec, acc_spec, acc_spec),
        scratch_shapes=[pltpu.VMEM((1, TS, 1), jnp.float32),   # running max
                        pltpu.VMEM((1, TS, 1), jnp.int32)],    # running argmax
        compiler_params=pltpu.CompilerParams(
            dimension_semantics=("parallel", "parallel", "arbitrary", "arbitrary"),
            vmem_limit_bytes=vmem_limit),
        cost_estimate=cost,
    )(predictions, targets.astype(jnp.int32).reshape(B, S, 1))

    nll = nll.reshape(B, P).sum(axis=1)
    cnt = cnt.reshape(B, P).sum(axis=1)
    eos = eos.reshape(B, P).sum(axis=1)
    return tok.reshape(B, S), nll, cnt, eos


# ----------------------------------------------------------------------------
# Data-dependent n-gram bookkeeping (plain JAX on the kernel's argmax output).
# ----------------------------------------------------------------------------
def _ngram_penalty(tokens, ngram_size):
    """Vectorized equivalent of the dict-based _detect_ngram_repetition."""
    # TODO(synk): dict-based n-gram counting is data-dependent; implemented as
    # O(L^2) pairwise comparisons in plain JAX rather than inside the kernel.
    L = tokens.shape[0]
    if L < ngram_size * 3:
        return jnp.float32(0.0)
    num = L - ngram_size + 1
    pos = jnp.arange(num)[:, None] + jnp.arange(ngram_size)[None, :]
    ngrams = tokens[pos]                                             # (num, n)
    eq = jnp.all(ngrams[:, None, :] == ngrams[None, :, :], axis=-1)  # (num, num)
    counts = jnp.sum(eq.astype(jnp.int32), axis=1)
    earlier = jnp.sum(jnp.tril(eq.astype(jnp.int32), k=-1), axis=1)
    is_first = earlier == 0
    per = jnp.where((counts >= 3) & is_first,
                    (counts - 2).astype(jnp.float32) * 0.1 * ngram_size,
                    0.0)
    return jnp.sum(per)


# ----------------------------------------------------------------------------
# Public forward (mirrors PatternFixLoss.forward)
# ----------------------------------------------------------------------------
def pattern_fix_loss(predictions, targets, attention_weights=None,
                     tile_budget_bytes=None):
    """predictions: (B,S,V) log-probabilities; targets: (B,S) int;
    attention_weights: optional (B,S,L_in)."""
    B, S, V = predictions.shape
    targets = targets.astype(jnp.int32)

    pred_tok, nll_b, cnt_b, eos_b = _pallas_loss_parts(
        predictions, targets, tile_budget_bytes=tile_budget_bytes)

    # main NLL loss: mean over non-pad positions (NaN if all-PAD, like torch).
    main_loss = jnp.sum(nll_b) / jnp.sum(cnt_b)

    # pattern penalty: vmapped over batch, looped over the 3 n-gram sizes.
    pattern = jnp.float32(0.0)
    for n in (2, 3, 4):
        if S >= n * 3:
            pattern = pattern + jnp.sum(
                jax.vmap(partial(_ngram_penalty, ngram_size=n))(pred_tok))
    pattern = pattern / B

    # EOS encouragement
    eos_loss = -jnp.sum(eos_b) / (B * S)
    has_eos_t = jnp.any(targets == EOS_TOKEN_ID, axis=1)
    has_eos_p = jnp.any(pred_tok == EOS_TOKEN_ID, axis=1)
    no_eos_penalty = jnp.sum((has_eos_t & (~has_eos_p)).astype(jnp.float32)) / B
    eos_enc = jnp.where(jnp.any(targets == EOS_TOKEN_ID),
                        eos_loss + 0.5 * no_eos_penalty,
                        jnp.float32(0.0))

    # attention diversity: L_in is small -> cheap XLA reduction; skipped if None.
    if attention_weights is not None:
        ent = -jnp.sum(attention_weights * jnp.log(attention_weights + 1e-8), axis=-1)
        attention_loss = -jnp.mean(ent) * 0.1
    else:
        attention_loss = jnp.float32(0.0)

    total = main_loss + 0.1 * pattern + 0.2 * eos_enc + 0.05 * attention_loss
    return {'total': total, 'main': main_loss, 'pattern': pattern,
            'eos': eos_enc, 'attention': attention_loss}


# ----------------------------------------------------------------------------
# Pure-JAX reference (computed "the torch way") for a runtime sanity check.
# ----------------------------------------------------------------------------
def _reference_loss(predictions, targets, attention_weights):
    B, S, V = predictions.shape
    p = predictions.astype(jnp.float32)
    targets = targets.astype(jnp.int32)
    nonpad = (targets != PAD_TOKEN_ID).astype(jnp.float32)
    gathered = jnp.take_along_axis(p, targets[..., None], axis=-1)[..., 0]
    main = -jnp.sum(gathered * nonpad) / jnp.sum(nonpad)

    pred_tok = jnp.argmax(p, axis=-1).astype(jnp.int32)
    pattern = jnp.float32(0.0)
    for n in (2, 3, 4):
        if S >= n * 3:
            pattern = pattern + jnp.sum(
                jax.vmap(partial(_ngram_penalty, ngram_size=n))(pred_tok))
    pattern = pattern / B

    eos_p = jax.nn.softmax(p, axis=-1)[:, :, EOS_TOKEN_ID]
    mask = (targets == EOS_TOKEN_ID).astype(jnp.float32)
    eos_loss = -jnp.mean(mask * jnp.log(eos_p + 1e-8))
    has_t = jnp.any(targets == EOS_TOKEN_ID, axis=1)
    has_p = jnp.any(pred_tok == EOS_TOKEN_ID, axis=1)
    no_eos = jnp.sum((has_t & (~has_p)).astype(jnp.float32)) / B
    eos_enc = jnp.where(jnp.any(targets == EOS_TOKEN_ID), eos_loss + 0.5 * no_eos, 0.0)

    if attention_weights is not None:
        ent = -jnp.sum(attention_weights * jnp.log(attention_weights + 1e-8), axis=-1)
        attention_loss = -jnp.mean(ent) * 0.1
    else:
        attention_loss = jnp.float32(0.0)

    total = main + 0.1 * pattern + 0.2 * eos_enc + 0.05 * attention_loss
    return {'total': total, 'main': main, 'pattern': pattern,
            'eos': eos_enc, 'attention': attention_loss}


# ----------------------------------------------------------------------------
# Self-test
# ----------------------------------------------------------------------------
def _run_case(name, B, S, V, L, dtype, use_attn, budget, tol):
    key = jax.random.PRNGKey(0)
    k1, k2, k3 = jax.random.split(key, 3)
    logits = jax.random.normal(k1, (B, S, V), jnp.float32)
    predictions = jax.nn.log_softmax(logits, axis=-1).astype(dtype)

    targets = jax.random.randint(k2, (B, S), 0, V).astype(jnp.int32)
    targets = targets.at[:, -1].set(EOS_TOKEN_ID)
    targets = targets.at[0, S // 2].set(EOS_TOKEN_ID)
    targets = targets.at[0, 5].set(PAD_TOKEN_ID)
    if B > 1:
        targets = targets.at[1, S - 4:].set(PAD_TOKEN_ID)

    attention = (jax.nn.softmax(jax.random.normal(k3, (B, S, L)), axis=-1)
                 if use_attn else None)

    fn = jax.jit(partial(pattern_fix_loss, tile_budget_bytes=budget))
    out = jax.block_until_ready(fn(predictions, targets, attention))
    ref = _reference_loss(predictions, targets, attention)
    for k in ("total", "main", "pattern", "eos", "attention"):
        a, b = float(out[k]), float(ref[k])
        assert abs(a - b) <= tol + tol * abs(b), (name, k, a, b)


if __name__ == "__main__":
    cases = [
        # default budget, single vocab tile, P=1
        dict(name="f32_fullV", B=2, S=128, V=128, L=8, dtype=jnp.float32,
             use_attn=True, budget=None, tol=1e-4),
        # forced tiny budget: bf16 native compute, vocab tiling, odd-B P=2 split
        dict(name="bf16_megacore_vtiled", B=1, S=256, V=256, L=8,
             dtype=jnp.bfloat16, use_attn=False, budget=32 * 1024, tol=2e-2),
        # vocab not a multiple of 128: partial trailing vocab tile is masked
        dict(name="f32_ragged_vocab", B=2, S=128, V=320, L=8, dtype=jnp.float32,
             use_attn=True, budget=96 * 1024, tol=1e-4),
    ]
    for c in cases:
        _run_case(**c)
    print("KERNEL_OK")
</pallas_src>

<mosaic_0001>
module attributes {stable_mosaic.version = 11 : i64} {
  func.func @_loss_kernel(%arg0: i32, %arg1: i32, %arg2: i32, %arg3: i32, %arg4: memref<1x128x128xf32, #tpu.memory_space<vmem>>, %arg5: memref<1x128x1xi32, #tpu.memory_space<vmem>>, %arg6: memref<1x1x128xi32, #tpu.memory_space<vmem>>, %arg7: memref<1x1x1xf32, #tpu.memory_space<vmem>>, %arg8: memref<1x1x1xf32, #tpu.memory_space<vmem>>, %arg9: memref<1x1x1xf32, #tpu.memory_space<vmem>>, %arg10: memref<1x128x1xf32, #tpu.memory_space<vmem>>, %arg11: memref<1x128x1xi32, #tpu.memory_space<vmem>>) attributes {dimension_semantics = [#tpu.dimension_semantics<parallel>, #tpu.dimension_semantics<parallel>, #tpu.dimension_semantics<arbitrary>, #tpu.dimension_semantics<arbitrary>], iteration_bounds = array<i64: 2, 1, 1, 1>, scalar_prefetch = 0 : i64, scratch_operands = 2 : i64, tpu.core_type = #tpu.core_type<tc>, window_params = [{transform_indices = @transform_0, window_bounds = array<i64: 1, 128, 128>}, {transform_indices = @transform_1, window_bounds = array<i64: 1, 128, 1>}, {transform_indices = @transform_2, window_bounds = array<i64: 1, 1, 128>}, {transform_indices = @transform_3, window_bounds = array<i64: 1, 1, 1>}, {transform_indices = @transform_4, window_bounds = array<i64: 1, 1, 1>}, {transform_indices = @transform_5, window_bounds = array<i64: 1, 1, 1>}]} {
    %c0_i32 = arith.constant 0 : i32
    %0 = arith.cmpi eq, %arg2, %c0_i32 : i32
    %c0_i32_0 = arith.constant 0 : i32
    %1 = arith.cmpi eq, %arg3, %c0_i32_0 : i32
    %2 = arith.andi %0, %1 : i1
    %3 = arith.extui %2 : i1 to i32
    %c0_i32_1 = arith.constant 0 : i32
    %4 = arith.cmpi ne, %3, %c0_i32_1 : i32
    scf.if %4 {
      %cst_42 = arith.constant 0.000000e+00 : f32
      %57 = vector.broadcast %cst_42 : f32 to vector<1x1x1xf32>
      %c0_43 = arith.constant 0 : index
      %c0_44 = arith.constant 0 : index
      %c0_45 = arith.constant 0 : index
      %58 = vector.load %arg7[%c0_43, %c0_44, %c0_45] : memref<1x1x1xf32, #tpu.memory_space<vmem>>, vector<1x1x1xf32>
      tpu.vector_store %arg7[%c0_43, %c0_44, %c0_45], %57 {strides = array<i32>} : memref<1x1x1xf32, #tpu.memory_space<vmem>>, vector<1x1x1xf32>,
      %cst_46 = arith.constant 0.000000e+00 : f32
      %59 = vector.broadcast %cst_46 : f32 to vector<1x1x1xf32>
      %c0_47 = arith.constant 0 : index
      %c0_48 = arith.constant 0 : index
      %c0_49 = arith.constant 0 : index
      %60 = vector.load %arg8[%c0_47, %c0_48, %c0_49] : memref<1x1x1xf32, #tpu.memory_space<vmem>>, vector<1x1x1xf32>
      tpu.vector_store %arg8[%c0_47, %c0_48, %c0_49], %59 {strides = array<i32>} : memref<1x1x1xf32, #tpu.memory_space<vmem>>, vector<1x1x1xf32>,
      %cst_50 = arith.constant 0.000000e+00 : f32
      %61 = vector.broadcast %cst_50 : f32 to vector<1x1x1xf32>
      %c0_51 = arith.constant 0 : index
      %c0_52 = arith.constant 0 : index
      %c0_53 = arith.constant 0 : index
      %62 = vector.load %arg9[%c0_51, %c0_52, %c0_53] : memref<1x1x1xf32, #tpu.memory_space<vmem>>, vector<1x1x1xf32>
      tpu.vector_store %arg9[%c0_51, %c0_52, %c0_53], %61 {strides = array<i32>} : memref<1x1x1xf32, #tpu.memory_space<vmem>>, vector<1x1x1xf32>,
    } else {
    }
    %c0_i32_2 = arith.constant 0 : i32
    %5 = arith.cmpi eq, %arg3, %c0_i32_2 : i32
    %6 = arith.extui %5 : i1 to i32
    %c0_i32_3 = arith.constant 0 : i32
    %7 = arith.cmpi ne, %6, %c0_i32_3 : i32
    scf.if %7 {
      %cst_42 = arith.constant 0xFF800000 : f32
      %57 = vector.broadcast %cst_42 : f32 to vector<1x128x1xf32>
      %c0_43 = arith.constant 0 : index
      %c0_44 = arith.constant 0 : index
      %c0_45 = arith.constant 0 : index
      %58 = vector.load %arg10[%c0_43, %c0_44, %c0_45] : memref<1x128x1xf32, #tpu.memory_space<vmem>>, vector<1x128x1xf32>
      tpu.vector_store %arg10[%c0_43, %c0_44, %c0_45], %57 {strides = array<i32>} : memref<1x128x1xf32, #tpu.memory_space<vmem>>, vector<1x128x1xf32>,
      %c0_i32_46 = arith.constant 0 : i32
      %59 = vector.broadcast %c0_i32_46 : i32 to vector<1x128x1xi32>
      %c0_47 = arith.constant 0 : index
      %c0_48 = arith.constant 0 : index
      %c0_49 = arith.constant 0 : index
      %60 = vector.load %arg11[%c0_47, %c0_48, %c0_49] : memref<1x128x1xi32, #tpu.memory_space<vmem>>, vector<1x128x1xi32>
      tpu.vector_store %arg11[%c0_47, %c0_48, %c0_49], %59 {strides = array<i32>} : memref<1x128x1xi32, #tpu.memory_space<vmem>>, vector<1x128x1xi32>,
    } else {
    }
    %c0 = arith.constant 0 : index
    %c0_4 = arith.constant 0 : index
    %c0_5 = arith.constant 0 : index
    %8 = vector.load %arg4[%c0, %c0_4, %c0_5] : memref<1x128x128xf32, #tpu.memory_space<vmem>>, vector<1x128x128xf32>
    %c0_6 = arith.constant 0 : index
    %c0_7 = arith.constant 0 : index
    %c0_8 = arith.constant 0 : index
    %9 = vector.load %arg5[%c0_6, %c0_7, %c0_8] : memref<1x128x1xi32, #tpu.memory_space<vmem>>, vector<1x128x1xi32>
    %10 = tpu.iota {dimensions = array<i32: 2>} : vector<1x128x128xi32>
    %11 = vector.broadcast %9 : vector<1x128x1xi32> to vector<1x128x128xi32>
    %12 = arith.cmpi eq, %10, %11 : vector<1x128x128xi32>
    %cst = arith.constant 0.000000e+00 : f32
    %13 = vector.broadcast %cst : f32 to vector<1x128x128xf32>
    %14 = arith.select %12, %8, %13 : vector<1x128x128xi1>, vector<1x128x128xf32>
    %cst_9 = arith.constant dense<0.000000e+00> : vector<1x128xf32>
    %15 = vector.multi_reduction <add>, %14, %cst_9 [2] : vector<1x128x128xf32> to vector<1x128xf32>
    %16 = vector.shape_cast %15 : vector<1x128xf32> to vector<1x128x1xf32>
    %c0_i32_10 = arith.constant 0 : i32
    %17 = vector.broadcast %c0_i32_10 : i32 to vector<1x128x1xi32>
    %18 = arith.cmpi ne, %9, %17 : vector<1x128x1xi32>
    %19 = arith.extui %18 : vector<1x128x1xi1> to vector<1x128x1xi32>
    %20 = arith.sitofp %19 : vector<1x128x1xi32> to vector<1x128x1xf32>
    %c0_11 = arith.constant 0 : index
    %c0_12 = arith.constant 0 : index
    %c0_13 = arith.constant 0 : index
    %21 = vector.load %arg7[%c0_11, %c0_12, %c0_13] : memref<1x1x1xf32, #tpu.memory_space<vmem>>, vector<1x1x1xf32>
    %cst_14 = arith.constant 0.000000e+00 : f32
    %22 = vector.broadcast %cst_14 : f32 to vector<1x128x1xf32>
    %23 = arith.subf %22, %16 : vector<1x128x1xf32>
    %24 = arith.mulf %23, %20 : vector<1x128x1xf32>
    %25 = vector.shape_cast %24 : vector<1x128x1xf32> to vector<1x1x128x1xf32>
    %cst_15 = arith.constant dense<0.000000e+00> : vector<1xf32>
    %26 = vector.multi_reduction <add>, %25, %cst_15 [1, 2, 3] : vector<1x1x128x1xf32> to vector<1xf32>
    %27 = vector.shape_cast %26 : vector<1xf32> to vector<1x1x1x1xf32>
    %28 = vector.extract %27[0, 0, 0, 0] : f32 from vector<1x1x1x1xf32>
    %29 = vector.broadcast %28 : f32 to vector<1x1x1xf32>
    %30 = arith.addf %21, %29 : vector<1x1x1xf32>
    %c0_16 = arith.constant 0 : index
    %c0_17 = arith.constant 0 : index
    %c0_18 = arith.constant 0 : index
    %31 = vector.load %arg7[%c0_16, %c0_17, %c0_18] : memref<1x1x1xf32, #tpu.memory_space<vmem>>, vector<1x1x1xf32>
    tpu.vector_store %arg7[%c0_16, %c0_17, %c0_18], %30 {strides = array<i32>} : memref<1x1x1xf32, #tpu.memory_space<vmem>>, vector<1x1x1xf32>,
    %c0_i32_19 = arith.constant 0 : i32
    %32 = arith.cmpi eq, %arg3, %c0_i32_19 : i32
    %33 = arith.extui %32 : i1 to i32
    %c0_i32_20 = arith.constant 0 : i32
    %34 = arith.cmpi ne, %33, %c0_i32_20 : i32
    scf.if %34 {
      %c0_42 = arith.constant 0 : index
      %c0_43 = arith.constant 0 : index
      %c0_44 = arith.constant 0 : index
      %57 = vector.load %arg8[%c0_42, %c0_43, %c0_44] : memref<1x1x1xf32, #tpu.memory_space<vmem>>, vector<1x1x1xf32>
      %58 = vector.shape_cast %20 : vector<1x128x1xf32> to vector<1x1x128x1xf32>
      %cst_45 = arith.constant dense<0.000000e+00> : vector<1xf32>
      %59 = vector.multi_reduction <add>, %58, %cst_45 [1, 2, 3] : vector<1x1x128x1xf32> to vector<1xf32>
      %60 = vector.shape_cast %59 : vector<1xf32> to vector<1x1x1x1xf32>
      %61 = vector.extract %60[0, 0, 0, 0] : f32 from vector<1x1x1x1xf32>
      %62 = vector.broadcast %61 : f32 to vector<1x1x1xf32>
      %63 = arith.addf %57, %62 : vector<1x1x1xf32>
      %c0_46 = arith.constant 0 : index
      %c0_47 = arith.constant 0 : index
      %c0_48 = arith.constant 0 : index
      %64 = vector.load %arg8[%c0_46, %c0_47, %c0_48] : memref<1x1x1xf32, #tpu.memory_space<vmem>>, vector<1x1x1xf32>
      tpu.vector_store %arg8[%c0_46, %c0_47, %c0_48], %63 {strides = array<i32>} : memref<1x1x1xf32, #tpu.memory_space<vmem>>, vector<1x1x1xf32>,
    } else {
    }
    %cst_21 = arith.constant dense<0xFF800000> : vector<1x128xf32>
    %35 = vector.multi_reduction <maximumf>, %8, %cst_21 [2] : vector<1x128x128xf32> to vector<1x128xf32>
    %36 = vector.shape_cast %35 : vector<1x128xf32> to vector<1x128x1xf32>
    %37 = vector.broadcast %36 : vector<1x128x1xf32> to vector<1x128x128xf32>
    %38 = arith.cmpf oeq, %8, %37 : vector<1x128x128xf32>
    %c128_i32 = arith.constant 128 : i32
    %39 = vector.broadcast %c128_i32 : i32 to vector<1x128x128xi32>
    %40 = arith.select %38, %10, %39 : vector<1x128x128xi1>, vector<1x128x128xi32>
    %cst_22 = arith.constant dense<2147483647> : vector<1x128xi32>
    %41 = vector.multi_reduction <minsi>, %40, %cst_22 [2] : vector<1x128x128xi32> to vector<1x128xi32>
    %42 = vector.shape_cast %41 : vector<1x128xi32> to vector<1x128x1xi32>
    %c0_23 = arith.constant 0 : index
    %c0_24 = arith.constant 0 : index
    %c0_25 = arith.constant 0 : index
    %43 = vector.load %arg10[%c0_23, %c0_24, %c0_25] : memref<1x128x1xf32, #tpu.memory_space<vmem>>, vector<1x128x1xf32>
    %44 = arith.cmpf ogt, %36, %43 : vector<1x128x1xf32>
    %c0_26 = arith.constant 0 : index
    %c0_27 = arith.constant 0 : index
    %c0_28 = arith.constant 0 : index
    %45 = vector.load %arg11[%c0_26, %c0_27, %c0_28] : memref<1x128x1xi32, #tpu.memory_space<vmem>>, vector<1x128x1xi32>
    %46 = arith.select %44, %42, %45 : vector<1x128x1xi1>, vector<1x128x1xi32>
    %c0_29 = arith.constant 0 : index
    %c0_30 = arith.constant 0 : index
    %c0_31 = arith.constant 0 : index
    %47 = vector.load %arg11[%c0_29, %c0_30, %c0_31] : memref<1x128x1xi32, #tpu.memory_space<vmem>>, vector<1x128x1xi32>
    tpu.vector_store %arg11[%c0_29, %c0_30, %c0_31], %46 {strides = array<i32>} : memref<1x128x1xi32, #tpu.memory_space<vmem>>, vector<1x128x1xi32>,
    %c0_32 = arith.constant 0 : index
    %c0_33 = arith.constant 0 : index
    %c0_34 = arith.constant 0 : index
    %48 = vector.load %arg10[%c0_32, %c0_33, %c0_34] : memref<1x128x1xf32, #tpu.memory_space<vmem>>, vector<1x128x1xf32>
    %49 = arith.maximumf %48, %36 : vector<1x128x1xf32>
    %c0_35 = arith.constant 0 : index
    %c0_36 = arith.constant 0 : index
    %c0_37 = arith.constant 0 : index
    %50 = vector.load %arg10[%c0_35, %c0_36, %c0_37] : memref<1x128x1xf32, #tpu.memory_space<vmem>>, vector<1x128x1xf32>
    tpu.vector_store %arg10[%c0_35, %c0_36, %c0_37], %49 {strides = array<i32>} : memref<1x128x1xf32, #tpu.memory_space<vmem>>, vector<1x128x1xf32>,
    %c0_i32_38 = arith.constant 0 : i32
    %51 = arith.cmpi eq, %arg3, %c0_i32_38 : i32
    %52 = arith.extui %51 : i1 to i32
    %c0_i32_39 = arith.constant 0 : i32
    %53 = arith.cmpi ne, %52, %c0_i32_39 : i32
    scf.if %53 {
      %c0_42 = arith.constant 0 : index
      %c0_43 = arith.constant 0 : index
      %c0_44 = arith.constant 0 : index
      %57 = vector.load %arg11[%c0_42, %c0_43, %c0_44] : memref<1x128x1xi32, #tpu.memory_space<vmem>>, vector<1x128x1xi32>
      %58 = vector.shape_cast %57 : vector<1x128x1xi32> to vector<1x1x128xi32>
      %c0_45 = arith.constant 0 : index
      %c0_46 = arith.constant 0 : index
      %c0_47 = arith.constant 0 : index
      %59 = vector.load %arg6[%c0_45, %c0_46, %c0_47] : memref<1x1x128xi32, #tpu.memory_space<vmem>>, vector<1x1x128xi32>
      tpu.vector_store %arg6[%c0_45, %c0_46, %c0_47], %58 {strides = array<i32>} : memref<1x1x128xi32, #tpu.memory_space<vmem>>, vector<1x1x128xi32>,
    } else {
    }
    %c0_i32_40 = arith.constant 0 : i32
    %54 = arith.cmpi eq, %arg3, %c0_i32_40 : i32
    %55 = arith.extui %54 : i1 to i32
    %c0_i32_41 = arith.constant 0 : i32
    %56 = arith.cmpi ne, %55, %c0_i32_41 : i32
    scf.if %56 {
      %57 = vector.extract_strided_slice %8 {offsets = [0, 0, 2], sizes = [1, 128, 1], strides = [1, 1, 1]} : vector<1x128x128xf32> to vector<1x128x1xf32>
      %c2_i32 = arith.constant 2 : i32
      %58 = vector.broadcast %c2_i32 : i32 to vector<1x128x1xi32>
      %59 = arith.cmpi eq, %9, %58 : vector<1x128x1xi32>
      %60 = arith.extui %59 : vector<1x128x1xi1> to vector<1x128x1xi32>
      %61 = arith.sitofp %60 : vector<1x128x1xi32> to vector<1x128x1xf32>
      %c0_42 = arith.constant 0 : index
      %c0_43 = arith.constant 0 : index
      %c0_44 = arith.constant 0 : index
      %62 = vector.load %arg9[%c0_42, %c0_43, %c0_44] : memref<1x1x1xf32, #tpu.memory_space<vmem>>, vector<1x1x1xf32>
      %63 = math.exp %57 : vector<1x128x1xf32>
      %cst_45 = arith.constant 9.99999993E-9 : f32
      %64 = vector.broadcast %cst_45 : f32 to vector<1x128x1xf32>
      %65 = arith.addf %63, %64 : vector<1x128x1xf32>
      %66 = math.log %65 : vector<1x128x1xf32>
      %67 = arith.mulf %61, %66 : vector<1x128x1xf32>
      %68 = vector.shape_cast %67 : vector<1x128x1xf32> to vector<1x1x128x1xf32>
      %cst_46 = arith.constant dense<0.000000e+00> : vector<1xf32>
      %69 = vector.multi_reduction <add>, %68, %cst_46 [1, 2, 3] : vector<1x1x128x1xf32> to vector<1xf32>
      %70 = vector.shape_cast %69 : vector<1xf32> to vector<1x1x1x1xf32>
      %71 = vector.extract %70[0, 0, 0, 0] : f32 from vector<1x1x1x1xf32>
      %72 = vector.broadcast %71 : f32 to vector<1x1x1xf32>
      %73 = arith.addf %62, %72 : vector<1x1x1xf32>
      %c0_47 = arith.constant 0 : index
      %c0_48 = arith.constant 0 : index
      %c0_49 = arith.constant 0 : index
      %74 = vector.load %arg9[%c0_47, %c0_48, %c0_49] : memref<1x1x1xf32, #tpu.memory_space<vmem>>, vector<1x1x1xf32>
      tpu.vector_store %arg9[%c0_47, %c0_48, %c0_49], %73 {strides = array<i32>} : memref<1x1x1xf32, #tpu.memory_space<vmem>>, vector<1x1x1xf32>,
    } else {
    }
    return
  }
  func.func @transform_0(%arg0: i32, %arg1: i32, %arg2: i32, %arg3: i32) -> (i32, i32, i32) {
    %c1_i32 = arith.constant 1 : i32
    %0 = arith.muli %arg1, %c1_i32 : i32
    %1 = arith.addi %0, %arg2 : i32
    %c0_i32 = arith.constant 0 : i32
    return %arg0, %1, %arg3 : i32, i32, i32
  }
  func.func @transform_1(%arg0: i32, %arg1: i32, %arg2: i32, %arg3: i32) -> (i32, i32, i32) {
    %c1_i32 = arith.constant 1 : i32
    %0 = arith.muli %arg1, %c1_i32 : i32
    %1 = arith.addi %0, %arg2 : i32
    %c0_i32 = arith.constant 0 : i32
    %c0_i32_0 = arith.constant 0 : i32
    return %arg0, %1, %c0_i32 : i32, i32, i32
  }
  func.func @transform_2(%arg0: i32, %arg1: i32, %arg2: i32, %arg3: i32) -> (i32, i32, i32) {
    %c1_i32 = arith.constant 1 : i32
    %0 = arith.muli %arg1, %c1_i32 : i32
    %1 = arith.addi %0, %arg2 : i32
    %c0_i32 = arith.constant 0 : i32
    %c0_i32_0 = arith.constant 0 : i32
    return %arg0, %c0_i32, %1 : i32, i32, i32
  }
  func.func @transform_3(%arg0: i32, %arg1: i32, %arg2: i32, %arg3: i32) -> (i32, i32, i32) {
    %c1_i32 = arith.constant 1 : i32
    %0 = arith.muli %arg0, %c1_i32 : i32
    %1 = arith.addi %0, %arg1 : i32
    %c0_i32 = arith.constant 0 : i32
    %c0_i32_0 = arith.constant 0 : i32
    %c0_i32_1 = arith.constant 0 : i32
    return %1, %c0_i32, %c0_i32_0 : i32, i32, i32
  }
  func.func @transform_4(%arg0: i32, %arg1: i32, %arg2: i32, %arg3: i32) -> (i32, i32, i32) {
    %c1_i32 = arith.constant 1 : i32
    %0 = arith.muli %arg0, %c1_i32 : i32
    %1 = arith.addi %0, %arg1 : i32
    %c0_i32 = arith.constant 0 : i32
    %c0_i32_0 = arith.constant 0 : i32
    %c0_i32_1 = arith.constant 0 : i32
    return %1, %c0_i32, %c0_i32_0 : i32, i32, i32
  }
  func.func @transform_5(%arg0: i32, %arg1: i32, %arg2: i32, %arg3: i32) -> (i32, i32, i32) {
    %c1_i32 = arith.constant 1 : i32
    %0 = arith.muli %arg0, %c1_i32 : i32
    %1 = arith.addi %0, %arg1 : i32
    %c0_i32 = arith.constant 0 : i32
    %c0_i32_0 = arith.constant 0 : i32
    %c0_i32_1 = arith.constant 0 : i32
    return %1, %c0_i32, %c0_i32_0 : i32, i32, i32
  }
}

</mosaic_0001>

<llo_original>
// kernel: pattern_fix_loss.1
$region0: #{pattern_fix_loss.1}
  #allocation0 [shape = 'u32[]', space=smem, size = 0x4, offset = 0x4, fixed_abs, tag = 'smem constant byte address 0x4 - core index']
  #allocation1 [shape = 'u32[72,128]{1,0:T(1,128)}', space=vmem, size = 0x9000, scoped, tag = 'internal scratch']
  #allocation2 [shape = 'f32[1,128,1]{2,1,0:T(8,128)}', space=vmem, size = 0x10000, scoped, tag = 'scratch operand']
  #allocation3 [shape = 's32[1,128,1]{2,1,0:T(8,128)}', space=vmem, size = 0x10000, scoped, tag = 'scratch operand']
  %s0 = inlined_call_operand.vmem [shape: f32[2,128,128], index: 0, kind: input, shape index: {}]
  %s1 = inlined_call_operand.vmem [shape: s32[2,128,1], index: 1, kind: input, shape index: {}]
  %s2 = inlined_call_operand.vmem [shape: s32[2,1,128], index: 2, kind: output, shape index: {0}]
  %s3 = inlined_call_operand.vmem [shape: f32[2,1,1], index: 3, kind: output, shape index: {1}]
  %s4 = inlined_call_operand.vmem [shape: f32[2,1,1], index: 4, kind: output, shape index: {2}]
  %s5 = inlined_call_operand.vmem [shape: f32[2,1,1], index: 5, kind: output, shape index: {3}]
  %6 = xla_tuple %s2, %s3, %s4, %s5
  %s7 = sld [smem:[#allocation0]]
  $region81: #{pattern_fix_loss.1} parent=0
    _
  %s9 = ssub.s32 1, %s7
  %s10 = scalar_select 0, %s9, %s7
  loop: start=0, step=1, limit=4
  $region2: #{pattern_fix_loss.1} parent=0 // loop_pre_header
    _
  $region3: #{pattern_fix_loss.1} parent=0 // loop_header
    %s12 = sphi 0, %s16
    %p13 = scmp.ge.s32.totalorder %s12, 4
    %s19 = sphi 0, %s45
    %s20 = sphi 0, %s41
    %s21 = sphi 0, %s37
    %s22 = sphi 0, %s33
    %s23 = sphi 0, %s19
    %s24 = sphi 0, %s20
    %s25 = sphi 0, %s21
    %s26 = sphi 0, %s22
    %s27 = sphi 0, %s23
    %s28 = sphi 0, %s24
    %s29 = sphi 0, %s25
    %s30 = sphi 0, %s26
    %s54 = sphi 0, %s56
    %s57 = sphi 0, %s54
    %s58 = sphi 0, %s57
    %s74 = sphi 0, %s58
    %s84 = sphi 0, %s86
    %s87 = sphi 0, %s84
    %s88 = sphi 0, %s87
    %s104 = sphi 0, %s88
    %s114 = sphi 0, %s116
    %s117 = sphi 0, %s114
    %s118 = sphi 0, %s117
    %s134 = sphi 0, %s118
    %s142 = sphi 0, %s144
    %s145 = sphi 0, %s142
    %s146 = sphi 0, %s145
    %s162 = sphi 0, %s146
    %s170 = sphi 0, %s172
    %s173 = sphi 0, %s170
    %s174 = sphi 0, %s173
    %s190 = sphi 0, %s174
    %s198 = sphi 0, %s200
    %s201 = sphi 0, %s198
    %s202 = sphi 0, %s201
    %s218 = sphi 0, %s202
  $region4: #{pattern_fix_loss.1} parent=0 // loop_header_branch
    %15 = sbr.rel (%p13) target = $region8
  $region5: #{pattern_fix_loss.1} parent=0 // loop_body
    %s17 = ssub.s32 %s12, 1
    %s18 = ssub.s32 %s12, 2
    %s31 = sadd.s32 1, %s22
    %p32 = scmp.ge.s32.totalorder %s31, 1
    %s33 = scalar_select %p32, 0, %s31
    %s34 = sadd.s32 1, %s21
    %s35 = scalar_select %p32, %s34, %s21
    %p36 = scmp.ge.s32.totalorder %s35, 1
    %s37 = scalar_select %p36, 0, %s35
    %s38 = sadd.s32 1, %s20
    %s39 = scalar_select %p36, %s38, %s20
    %p40 = scmp.ge.s32.totalorder %s39, 1
    %s41 = scalar_select %p40, 0, %s39
    %s42 = sadd.s32 1, %s19
    %s43 = scalar_select %p40, %s42, %s19
    %p44 = scmp.ge.s32.totalorder %s43, 2
    %s45 = scalar_select %p44, 0, %s43
    %s46 = sadd.s32 %s20, %s21
    %s47 = sadd.s32 %s41, %s37
    %s48 = ssub.s32 %s19, %s45
    %s49 = ssub.s32 %s46, %s47
    %s50 = sor.u32 %s48, %s49
    %s51 = ssub.s32 %s22, %s33
    %s52 = sor.u32 %s50, %s51
    %p53 = scmp.eq.s32.totalorder %s52, 0
    %s55 = sadd.s32 %s54, 1
    %s56 = scalar_select %p53, %s54, %s55
    %p59 = pneg %p53
    %p60 = scmp.eq.s32.totalorder %s12, 1
    %p61 = por %p59, %p60
    %p62 = scmp.ne.s32.totalorder %s54, %s57
    %p63 = scmp.eq.s32.totalorder %s12, 0
    %p64 = por %p62, %p63
    %p65 = scmp.ne.s32.totalorder %s54, %s57
    %p66 = scmp.eq.s32.totalorder %s17, 1
    %p67 = por %p65, %p66
    %p68 = scmp.ne.s32.totalorder %s57, %s58
    %p69 = scmp.eq.s32.totalorder %s17, 0
    %p70 = por %p68, %p69
    %p71 = scmp.ne.s32.totalorder %s57, %s58
    %p72 = scmp.eq.s32.totalorder %s18, 1
    %p73 = por %p71, %p72
    %p75 = scmp.ne.s32.totalorder %s58, %s74
    %p76 = scmp.eq.s32.totalorder %s18, 0
    %p77 = por %p75, %p76
    %s78 = sadd.s32 %s20, %s21
    %s79 = sadd.s32 %s41, %s37
    %s80 = ssub.s32 %s19, %s45
    %s81 = ssub.s32 %s78, %s79
    %s82 = sor.u32 %s80, %s81
    %p83 = scmp.eq.s32.totalorder %s82, 0
    %s85 = sadd.s32 %s84, 1
    %s86 = scalar_select %p83, %s84, %s85
    %p89 = pneg %p83
    %p90 = scmp.eq.s32.totalorder %s12, 1
    %p91 = por %p89, %p90
    %p92 = scmp.ne.s32.totalorder %s84, %s87
    %p93 = scmp.eq.s32.totalorder %s12, 0
    %p94 = por %p92, %p93
    %p95 = scmp.ne.s32.totalorder %s84, %s87
    %p96 = scmp.eq.s32.totalorder %s17, 1
    %p97 = por %p95, %p96
    %p98 = scmp.ne.s32.totalorder %s87, %s88
    %p99 = scmp.eq.s32.totalorder %s17, 0
    %p100 = por %p98, %p99
    %p101 = scmp.ne.s32.totalorder %s87, %s88
    %p102 = scmp.eq.s32.totalorder %s18, 1
    %p103 = por %p101, %p102
    %p105 = scmp.ne.s32.totalorder %s88, %s104
    %p106 = scmp.eq.s32.totalorder %s18, 0
    %p107 = por %p105, %p106
    %s108 = sadd.s32 %s20, %s21
    %s109 = sadd.s32 %s41, %s37
    %s110 = ssub.s32 %s19, %s45
    %s111 = ssub.s32 %s108, %s109
    %s112 = sor.u32 %s110, %s111
    %p113 = scmp.eq.s32.totalorder %s112, 0
    %s115 = sadd.s32 %s114, 1
    %s116 = scalar_select %p113, %s114, %s115
    %p119 = pneg %p113
    %p120 = scmp.eq.s32.totalorder %s12, 1
    %p121 = por %p119, %p120
    %p122 = scmp.ne.s32.totalorder %s114, %s117
    %p123 = scmp.eq.s32.totalorder %s12, 0
    %p124 = por %p122, %p123
    %p125 = scmp.ne.s32.totalorder %s114, %s117
    %p126 = scmp.eq.s32.totalorder %s17, 1
    %p127 = por %p125, %p126
    %p128 = scmp.ne.s32.totalorder %s117, %s118
    %p129 = scmp.eq.s32.totalorder %s17, 0
    %p130 = por %p128, %p129
    %p131 = scmp.ne.s32.totalorder %s117, %s118
    %p132 = scmp.eq.s32.totalorder %s18, 1
    %p133 = por %p131, %p132
    %p135 = scmp.ne.s32.totalorder %s118, %s134
    %p136 = scmp.eq.s32.totalorder %s18, 0
    %p137 = por %p135, %p136
    %s138 = sadd.s32 %s19, %s20
    %s139 = sadd.s32 %s45, %s41
    %s140 = ssub.s32 %s138, %s139
    %p141 = scmp.eq.s32.totalorder %s140, 0
    %s143 = sadd.s32 %s142, 1
    %s144 = scalar_select %p141, %s142, %s143
    %p147 = pneg %p141
    %p148 = scmp.eq.s32.totalorder %s12, 1
    %p149 = por %p147, %p148
    %p150 = scmp.ne.s32.totalorder %s142, %s145
    %p151 = scmp.eq.s32.totalorder %s12, 0
    %p152 = por %p150, %p151
    %p153 = scmp.ne.s32.totalorder %s142, %s145
    %p154 = scmp.eq.s32.totalorder %s17, 1
    %p155 = por %p153, %p154
    %p156 = scmp.ne.s32.totalorder %s145, %s146
    %p157 = scmp.eq.s32.totalorder %s17, 0
    %p158 = por %p156, %p157
    %p159 = scmp.ne.s32.totalorder %s145, %s146
    %p160 = scmp.eq.s32.totalorder %s18, 1
    %p161 = por %p159, %p160
    %p163 = scmp.ne.s32.totalorder %s146, %s162
    %p164 = scmp.eq.s32.totalorder %s18, 0
    %p165 = por %p163, %p164
    %s166 = sadd.s32 %s19, %s20
    %s167 = sadd.s32 %s45, %s41
    %s168 = ssub.s32 %s166, %s167
    %p169 = scmp.eq.s32.totalorder %s168, 0
    %s171 = sadd.s32 %s170, 1
    %s172 = scalar_select %p169, %s170, %s171
    %p175 = pneg %p169
    %p176 = scmp.eq.s32.totalorder %s12, 1
    %p177 = por %p175, %p176
    %p178 = scmp.ne.s32.totalorder %s170, %s173
    %p179 = scmp.eq.s32.totalorder %s12, 0
    %p180 = por %p178, %p179
    %p181 = scmp.ne.s32.totalorder %s170, %s173
    %p182 = scmp.eq.s32.totalorder %s17, 1
    %p183 = por %p181, %p182
    %p184 = scmp.ne.s32.totalorder %s173, %s174
    %p185 = scmp.eq.s32.totalorder %s17, 0
    %p186 = por %p184, %p185
    %p187 = scmp.ne.s32.totalorder %s173, %s174
    %p188 = scmp.eq.s32.totalorder %s18, 1
    %p189 = por %p187, %p188
    %p191 = scmp.ne.s32.totalorder %s174, %s190
    %p192 = scmp.eq.s32.totalorder %s18, 0
    %p193 = por %p191, %p192
    %s194 = sadd.s32 %s19, %s20
    %s195 = sadd.s32 %s45, %s41
    %s196 = ssub.s32 %s194, %s195
    %p197 = scmp.eq.s32.totalorder %s196, 0
    %s199 = sadd.s32 %s198, 1
    %s200 = scalar_select %p197, %s198, %s199
    %p203 = pneg %p197
    %p204 = scmp.eq.s32.totalorder %s12, 1
    %p205 = por %p203, %p204
    %p206 = scmp.ne.s32.totalorder %s198, %s201
    %p207 = scmp.eq.s32.totalorder %s12, 0
    %p208 = por %p206, %p207
    %p209 = scmp.ne.s32.totalorder %s198, %s201
    %p210 = scmp.eq.s32.totalorder %s17, 1
    %p211 = por %p209, %p210
    %p212 = scmp.ne.s32.totalorder %s201, %s202
    %p213 = scmp.eq.s32.totalorder %s17, 0
    %p214 = por %p212, %p213
    %p215 = scmp.ne.s32.totalorder %s201, %s202
    %p216 = scmp.eq.s32.totalorder %s18, 1
    %p217 = por %p215, %p216
    %p219 = scmp.ne.s32.totalorder %s202, %s218
    %p220 = scmp.eq.s32.totalorder %s18, 0
    %p221 = por %p219, %p220
    %p222 = scmp.le.s32.totalorder 1, %s12
    %p223 = scmp.lt.s32.totalorder %s12, 3
    %p224 = pnand %p222, %p223
    %p225 = pneg %p224
    // Predicated region
    $region9: #{pattern_fix_loss.1} parent=5 // pred_check
      _
    $region10: #{pattern_fix_loss.1} parent=5 // pred_check_branch
      %227 = sbr.rel (%p224) target = $region12
    $region11: #{pattern_fix_loss.1} parent=5 // pred_region
      %s228 = ssub.s32 %s12, 1
    $region12: #{pattern_fix_loss.1} parent=5 // pred_fallthru
      _
    %p229 = scmp.lt.s32.totalorder %s12, 2
    // Predicated region
    $region13: #{pattern_fix_loss.1} parent=5 // pred_check
      %p230 = pneg %p229
    $region14: #{pattern_fix_loss.1} parent=5 // pred_check_branch
      %232 = sbr.rel (%p230) target = $region16
    $region15: #{pattern_fix_loss.1} parent=5 // pred_region
      // Predicated region
      $region17: #{pattern_fix_loss.1} parent=15 // pred_check
        %p233 = pneg %p64
      $region18: #{pattern_fix_loss.1} parent=15 // pred_check_branch
        %235 = sbr.rel (%p233) target = $region20
      $region19: #{pattern_fix_loss.1} parent=15 // pred_region
        %s236 = sadd.s32 %s20, %s21
        %s237 = smul.u32 16, %s236
        %p238 = scmp.lt.s32.totalorder %s19, 1
        %s239 = scalar_select %p238, %s19, 1
        %p240 = scmp.lt.s32.totalorder %s237, 15
        %s241 = scalar_select %p240, %s237, 15
        %p242 = scmp.lt.s32.totalorder %s22, 0
        %s243 = scalar_select %p242, %s22, 0
        %s244 = sadd.s32 %s243, %s241
        %s245 = smul.addr %s239, 16
        %s246 = sadd.s32 %s244, %s245
        %s247 = smul.addr %s246, 8
        %s248 = scalar_lea.vmem %s0, %s247
        %s249 = sadd.s32 %s20, %s21
        %s250 = smul.u32 16, %s249
      $region20: #{pattern_fix_loss.1} parent=15 // pred_fallthru
        _
      // Predicated region
      $region21: #{pattern_fix_loss.1} parent=15 // pred_check
        %p251 = pneg %p94
      $region22: #{pattern_fix_loss.1} parent=15 // pred_check_branch
        %253 = sbr.rel (%p251) target = $region24
      $region23: #{pattern_fix_loss.1} parent=15 // pred_region
        %s254 = sadd.s32 %s20, %s21
        %s255 = smul.u32 16, %s254
        %p256 = scmp.lt.s32.totalorder %s19, 1
        %s257 = scalar_select %p256, %s19, 1
        %p258 = scmp.lt.s32.totalorder %s255, 15
        %s259 = scalar_select %p258, %s255, 15
        %s260 = smul.addr %s257, 16
        %s261 = sadd.s32 %s259, %s260
        %s262 = smul.addr %s261, 8
        %s263 = scalar_lea.vmem %s1, %s262
        %s264 = sadd.s32 %s20, %s21
        %s265 = smul.u32 16, %s264
      $region24: #{pattern_fix_loss.1} parent=15 // pred_fallthru
        _
    $region16: #{pattern_fix_loss.1} parent=5 // pred_fallthru
      _
    %p266 = scmp.le.s32.totalorder 1, %s12
    %p267 = scmp.lt.s32.totalorder %s12, 3
    %p268 = pnand %p266, %p267
    %p269 = pneg %p268
    // Predicated region
    $region25: #{pattern_fix_loss.1} parent=5 // pred_check
      _
    $region26: #{pattern_fix_loss.1} parent=5 // pred_check_branch
      %271 = sbr.rel (%p268) target = $region28
    $region27: #{pattern_fix_loss.1} parent=5 // pred_region
      %s272 = ssub.s32 %s12, 1
      %s273 = sadd.s32 %s24, %s25
      %s274 = smul.u32 16, %s273
      %p275 = scmp.lt.s32.totalorder %s23, 1
      %s276 = scalar_select %p275, %s23, 1
      %p277 = scmp.lt.s32.totalorder %s274, 15
      %s278 = scalar_select %p277, %s274, 15
      %p279 = scmp.lt.s32.totalorder %s26, 0
      %s280 = scalar_select %p279, %s26, 0
      %s281 = sadd.s32 %s280, %s278
      %s282 = smul.addr %s276, 16
      %s283 = sadd.s32 %s281, %s282
      %s284 = smul.addr %s283, 8
      %s285 = scalar_lea.vmem %s0, %s284
      %p286 = pneg %p70
      %p287 = pneg %p67
      %s288 = sadd.s32 %s24, %s25
      %s289 = smul.u32 16, %s288
      %p290 = scmp.lt.s32.totalorder %s23, 1
      %s291 = scalar_select %p290, %s23, 1
      %p292 = scmp.lt.s32.totalorder %s289, 15
      %s293 = scalar_select %p292, %s289, 15
      %s294 = smul.addr %s291, 16
      %s295 = sadd.s32 %s293, %s294
      %s296 = smul.addr %s295, 8
      %s297 = scalar_lea.vmem %s1, %s296
      %p298 = pneg %p100
      %p299 = pneg %p97
      %p300 = pneg %p130
      %p301 = pneg %p127
      %s302 = sadd.s32 %s24, %s25
      %p303 = scmp.lt.s32.totalorder %s23, 1
      %s304 = scalar_select %p303, %s23, 1
      %p305 = scmp.lt.s32.totalorder %s302, 0
      %s306 = scalar_select %p305, %s302, 0
      %s307 = sadd.s32 %s306, %s304
      %s308 = scalar_lea.vmem %s2, %s307
      %p309 = pneg %p158
      %p310 = pneg %p155
      %s311 = sadd.s32 %s23, %s24
      %p312 = scmp.lt.s32.totalorder %s311, 1
      %s313 = scalar_select %p312, %s311, 1
      %s314 = scalar_lea.vmem %s3, %s313
      %p315 = pneg %p186
      %p316 = pneg %p183
      %s317 = sadd.s32 %s23, %s24
      %p318 = scmp.lt.s32.totalorder %s317, 1
      %s319 = scalar_select %p318, %s317, 1
      %s320 = scalar_lea.vmem %s4, %s319
      %p321 = pneg %p214
      %p322 = pneg %p211
      %s323 = sadd.s32 %s23, %s24
      %p324 = scmp.lt.s32.totalorder %s323, 1
      %s325 = scalar_select %p324, %s323, 1
      %s326 = scalar_lea.vmem %s5, %s325
      %s327 = sadd.s32 %s24, %s25
      %s328 = smul.u32 16, %s327
      %p329 = scmp.lt.s32.totalorder %s23, 1
      %s330 = scalar_select %p329, %s23, 1
      %p331 = scmp.lt.s32.totalorder %s328, 15
      %s332 = scalar_select %p331, %s328, 15
      %p333 = scmp.lt.s32.totalorder %s26, 0
      %s334 = scalar_select %p333, %s26, 0
      %s335 = sadd.s32 %s334, %s332
      %s336 = smul.addr %s330, 16
      %s337 = sadd.s32 %s335, %s336
      %s338 = smul.addr %s337, 8
      %s339 = scalar_lea.vmem %s0, %s338
      %s340 = sadd.s32 %s24, %s25
      %s341 = smul.u32 16, %s340
      %s342 = sadd.s32 %s24, %s25
      %s343 = smul.u32 16, %s342
      %p344 = scmp.lt.s32.totalorder %s23, 1
      %s345 = scalar_select %p344, %s23, 1
      %p346 = scmp.lt.s32.totalorder %s343, 15
      %s347 = scalar_select %p346, %s343, 15
      %s348 = smul.addr %s345, 16
      %s349 = sadd.s32 %s347, %s348
      %s350 = smul.addr %s349, 8
      %s351 = scalar_lea.vmem %s1, %s350
      %s352 = sadd.s32 %s24, %s25
      %s353 = smul.u32 16, %s352
      %s354 = sadd.s32 %s24, %s25
      %p355 = scmp.lt.s32.totalorder %s23, 1
      %s356 = scalar_select %p355, %s23, 1
      %p357 = scmp.lt.s32.totalorder %s354, 0
      %s358 = scalar_select %p357, %s354, 0
      %s359 = sadd.s32 %s358, %s356
      %s360 = scalar_lea.vmem %s2, %s359
      %s361 = sadd.s32 %s24, %s25
      %s362 = sadd.s32 %s23, %s24
      %p363 = scmp.lt.s32.totalorder %s362, 1
      %s364 = scalar_select %p363, %s362, 1
      %s365 = scalar_lea.vmem %s3, %s364
      %s366 = sadd.s32 %s23, %s24
      %s367 = sadd.s32 %s23, %s24
      %p368 = scmp.lt.s32.totalorder %s367, 1
      %s369 = scalar_select %p368, %s367, 1
      %s370 = scalar_lea.vmem %s4, %s369
      %s371 = sadd.s32 %s23, %s24
      %s372 = sadd.s32 %s23, %s24
      %p373 = scmp.lt.s32.totalorder %s372, 1
      %s374 = scalar_select %p373, %s372, 1
      %s375 = scalar_lea.vmem %s5, %s374
      %s376 = sadd.s32 %s23, %s24
      %p377 = scmp.eq.s32.totalorder %s25, 0
      %p378 = scmp.eq.s32.totalorder %s26, 0
      %p379 = pnand %p377, %p378
      %p380 = pneg %p379
      // Predicated region
      $region29: #{pattern_fix_loss.1} parent=27 // pred_check
        _
      $region30: #{pattern_fix_loss.1} parent=27 // pred_check_branch
        %382 = sbr.rel (%p379) target = $region32
      $region31: #{pattern_fix_loss.1} parent=27 // pred_region
        %vm383 = vcmask 0
        %384 = vst.msk [vmem:[%s365] sm:$0x1] %vm383, 0.0
        %385 = vst.msk [vmem:[%s370] sm:$0x1] %vm383, 0.0
        %386 = vst.msk [vmem:[%s375] sm:$0x1] %vm383, 0.0
      $region32: #{pattern_fix_loss.1} parent=27 // pred_fallthru
        _
      // Predicated region
      $region33: #{pattern_fix_loss.1} parent=27 // pred_check
        %p387 = pneg %p378
      $region34: #{pattern_fix_loss.1} parent=27 // pred_check_branch
        %389 = sbr.rel (%p387) target = $region36
      $region35: #{pattern_fix_loss.1} parent=27 // pred_region
        %vm390 = vcmask 7168
        %391 = vst.msk [vmem:[#allocation2] sm:$0xff] %vm390, -inf
        %392 = vst.msk [vmem:[#allocation2 + $0x8] sm:$0xff] %vm390, -inf
        %393 = vst.msk [vmem:[#allocation2 + $0x10] sm:$0xff] %vm390, -inf
        %394 = vst.msk [vmem:[#allocation2 + $0x18] sm:$0xff] %vm390, -inf
        %395 = vst.msk [vmem:[#allocation2 + $0x20] sm:$0xff] %vm390, -inf
        %396 = vst.msk [vmem:[#allocation2 + $0x28] sm:$0xff] %vm390, -inf
        %397 = vst.msk [vmem:[#allocation2 + $0x30] sm:$0xff] %vm390, -inf
        %398 = vst.msk [vmem:[#allocation2 + $0x38] sm:$0xff] %vm390, -inf
        %399 = vst.msk [vmem:[#allocation2 + $0x40] sm:$0xff] %vm390, -inf
        %400 = vst.msk [vmem:[#allocation2 + $0x48] sm:$0xff] %vm390, -inf
        %401 = vst.msk [vmem:[#allocation2 + $0x50] sm:$0xff] %vm390, -inf
        %402 = vst.msk [vmem:[#allocation2 + $0x58] sm:$0xff] %vm390, -inf
        %403 = vst.msk [vmem:[#allocation2 + $0x60] sm:$0xff] %vm390, -inf
        %404 = vst.msk [vmem:[#allocation2 + $0x68] sm:$0xff] %vm390, -inf
        %405 = vst.msk [vmem:[#allocation2 + $0x70] sm:$0xff] %vm390, -inf
        %406 = vst.msk [vmem:[#allocation2 + $0x78] sm:$0xff] %vm390, -inf
        %407 = vst.msk [vmem:[#allocation3] sm:$0xff] %vm390, 0
        %408 = vst.msk [vmem:[#allocation3 + $0x8] sm:$0xff] %vm390, 0
        %409 = vst.msk [vmem:[#allocation3 + $0x10] sm:$0xff] %vm390, 0
        %410 = vst.msk [vmem:[#allocation3 + $0x18] sm:$0xff] %vm390, 0
        %411 = vst.msk [vmem:[#allocation3 + $0x20] sm:$0xff] %vm390, 0
        %412 = vst.msk [vmem:[#allocation3 + $0x28] sm:$0xff] %vm390, 0
        %413 = vst.msk [vmem:[#allocation3 + $0x30] sm:$0xff] %vm390, 0
        %414 = vst.msk [vmem:[#allocation3 + $0x38] sm:$0xff] %vm390, 0
        %415 = vst.msk [vmem:[#allocation3 + $0x40] sm:$0xff] %vm390, 0
        %416 = vst.msk [vmem:[#allocation3 + $0x48] sm:$0xff] %vm390, 0
        %417 = vst.msk [vmem:[#allocation3 + $0x50] sm:$0xff] %vm390, 0
        %418 = vst.msk [vmem:[#allocation3 + $0x58] sm:$0xff] %vm390, 0
        %419 = vst.msk [vmem:[#allocation3 + $0x60] sm:$0xff] %vm390, 0
        %420 = vst.msk [vmem:[#allocation3 + $0x68] sm:$0xff] %vm390, 0
        %421 = vst.msk [vmem:[#allocation3 + $0x70] sm:$0xff] %vm390, 0
        %422 = vst.msk [vmem:[#allocation3 + $0x78] sm:$0xff] %vm390, 0
      $region36: #{pattern_fix_loss.1} parent=27 // pred_fallthru
        _
      %v423 = vld [vmem:[%s339] sm:$0xff]
      %v424 = vld [vmem:[%s339 + $0x8] sm:$0xff]
      %v425 = vld [vmem:[%s339 + $0x10] sm:$0xff]
      %v426 = vld [vmem:[%s339 + $0x18] sm:$0xff]
      %v427 = vld [vmem:[%s339 + $0x20] sm:$0xff]
      %v428 = vld [vmem:[%s339 + $0x28] sm:$0xff]
      %v429 = vld [vmem:[%s339 + $0x30] sm:$0xff]
      %v430 = vld [vmem:[%s339 + $0x38] sm:$0xff]
      %v431 = vld [vmem:[%s339 + $0x40] sm:$0xff]
      %v432 = vld [vmem:[%s339 + $0x48] sm:$0xff]
      %v433 = vld [vmem:[%s339 + $0x50] sm:$0xff]
      %v434 = vld [vmem:[%s339 + $0x58] sm:$0xff]
      %v435 = vld [vmem:[%s339 + $0x60] sm:$0xff]
      %v436 = vld [vmem:[%s339 + $0x68] sm:$0xff]
      %v437 = vld [vmem:[%s339 + $0x70] sm:$0xff]
      %v438 = vld [vmem:[%s339 + $0x78] sm:$0xff]
      %v439 = vld [vmem:[%s351] sm:$0xff]
      %v440 = vld [vmem:[%s351 + $0x8] sm:$0xff]
      %v441 = vld [vmem:[%s351 + $0x10] sm:$0xff]
      %v442 = vld [vmem:[%s351 + $0x18] sm:$0xff]
      %v443 = vld [vmem:[%s351 + $0x20] sm:$0xff]
      %v444 = vld [vmem:[%s351 + $0x28] sm:$0xff]
      %v445 = vld [vmem:[%s351 + $0x30] sm:$0xff]
      %v446 = vld [vmem:[%s351 + $0x38] sm:$0xff]
      %v447 = vld [vmem:[%s351 + $0x40] sm:$0xff]
      %v448 = vld [vmem:[%s351 + $0x48] sm:$0xff]
      %v449 = vld [vmem:[%s351 + $0x50] sm:$0xff]
      %v450 = vld [vmem:[%s351 + $0x58] sm:$0xff]
      %v451 = vld [vmem:[%s351 + $0x60] sm:$0xff]
      %v452 = vld [vmem:[%s351 + $0x68] sm:$0xff]
      %v453 = vld [vmem:[%s351 + $0x70] sm:$0xff]
      %v454 = vld [vmem:[%s351 + $0x78] sm:$0xff]
      %v455 = vlaneseq
      %v456 = vand.u32 %v455, 127
      %457 = vset.pattern.permute.xlu0 0
      %458 = vperm.xlu0 %457, %v439
      %v459 = vpop.permute.xlu0 %458
      %460 = vset.pattern.permute.xlu0 0
      %461 = vperm.xlu0 %460, %v440
      %v462 = vpop.permute.xlu0 %461
      %463 = vset.pattern.permute.xlu0 0
      %464 = vperm.xlu0 %463, %v441
      %v465 = vpop.permute.xlu0 %464
      %466 = vset.pattern.permute.xlu0 0
      %467 = vperm.xlu0 %466, %v442
      %v468 = vpop.permute.xlu0 %467
      %469 = vset.pattern.permute.xlu0 0
      %470 = vperm.xlu0 %469, %v443
      %v471 = vpop.permute.xlu0 %470
      %472 = vset.pattern.permute.xlu0 0
      %473 = vperm.xlu0 %472, %v444
      %v474 = vpop.permute.xlu0 %473
      %475 = vset.pattern.permute.xlu0 0
      %476 = vperm.xlu0 %475, %v445
      %v477 = vpop.permute.xlu0 %476
      %478 = vset.pattern.permute.xlu0 0
      %479 = vperm.xlu0 %478, %v446
      %v480 = vpop.permute.xlu0 %479
      %481 = vset.pattern.permute.xlu0 0
      %482 = vperm.xlu0 %481, %v447
      %v483 = vpop.permute.xlu0 %482
      %484 = vset.pattern.permute.xlu0 0
      %485 = vperm.xlu0 %484, %v448
      %v486 = vpop.permute.xlu0 %485
      %487 = vset.pattern.permute.xlu0 0
      %488 = vperm.xlu0 %487, %v449
      %v489 = vpop.permute.xlu0 %488
      %490 = vset.pattern.permute.xlu0 0
      %491 = vperm.xlu0 %490, %v450
      %v492 = vpop.permute.xlu0 %491
      %493 = vset.pattern.permute.xlu0 0
      %494 = vperm.xlu0 %493, %v451
      %v495 = vpop.permute.xlu0 %494
      %496 = vset.pattern.permute.xlu0 0
      %497 = vperm.xlu0 %496, %v452
      %v498 = vpop.permute.xlu0 %497
      %499 = vset.pattern.permute.xlu0 0
      %500 = vperm.xlu0 %499, %v453
      %v501 = vpop.permute.xlu0 %500
      %502 = vset.pattern.permute.xlu0 0
      %503 = vperm.xlu0 %502, %v454
      %v504 = vpop.permute.xlu0 %503
      %vm505 = vcmp.eq.s32.totalorder %v456, %v459
      %vm506 = vcmp.eq.s32.totalorder %v456, %v462
      %vm507 = vcmp.eq.s32.totalorder %v456, %v465
      %vm508 = vcmp.eq.s32.totalorder %v456, %v468
      %vm509 = vcmp.eq.s32.totalorder %v456, %v471
      %vm510 = vcmp.eq.s32.totalorder %v456, %v474
      %vm511 = vcmp.eq.s32.totalorder %v456, %v477
      %vm512 = vcmp.eq.s32.totalorder %v456, %v480
      %vm513 = vcmp.eq.s32.totalorder %v456, %v483
      %vm514 = vcmp.eq.s32.totalorder %v456, %v486
      %vm515 = vcmp.eq.s32.totalorder %v456, %v489
      %vm516 = vcmp.eq.s32.totalorder %v456, %v492
      %vm517 = vcmp.eq.s32.totalorder %v456, %v495
      %vm518 = vcmp.eq.s32.totalorder %v456, %v498
      %vm519 = vcmp.eq.s32.totalorder %v456, %v501
      %vm520 = vcmp.eq.s32.totalorder %v456, %v504
      %v521 = vsel %vm505, %v423, 0.0
      %v522 = vsel %vm506, %v424, 0.0
      %v523 = vsel %vm507, %v425, 0.0
      %v524 = vsel %vm508, %v426, 0.0
      %v525 = vsel %vm509, %v427, 0.0
      %v526 = vsel %vm510, %v428, 0.0
      %v527 = vsel %vm511, %v429, 0.0
      %v528 = vsel %vm512, %v430, 0.0
      %v529 = vsel %vm513, %v431, 0.0
      %v530 = vsel %vm514, %v432, 0.0
      %v531 = vsel %vm515, %v433, 0.0
      %v532 = vsel %vm516, %v434, 0.0
      %v533 = vsel %vm517, %v435, 0.0
      %v534 = vsel %vm518, %v436, 0.0
      %v535 = vsel %vm519, %v437, 0.0
      %v536 = vsel %vm520, %v438, 0.0
      %537 = vadd.xlane.f32.xlu0 %v521
      %v538 = vpop.xlane.xlu0 %537
      %539 = vadd.xlane.f32.xlu0 %v522
      %v540 = vpop.xlane.xlu0 %539
      %541 = vadd.xlane.f32.xlu0 %v523
      %v542 = vpop.xlane.xlu0 %541
      %543 = vadd.xlane.f32.xlu0 %v524
      %v544 = vpop.xlane.xlu0 %543
      %545 = vadd.xlane.f32.xlu0 %v525
      %v546 = vpop.xlane.xlu0 %545
      %547 = vadd.xlane.f32.xlu0 %v526
      %v548 = vpop.xlane.xlu0 %547
      %549 = vadd.xlane.f32.xlu0 %v527
      %v550 = vpop.xlane.xlu0 %549
      %551 = vadd.xlane.f32.xlu0 %v528
      %v552 = vpop.xlane.xlu0 %551
      %553 = vadd.xlane.f32.xlu0 %v529
      %v554 = vpop.xlane.xlu0 %553
      %555 = vadd.xlane.f32.xlu0 %v530
      %v556 = vpop.xlane.xlu0 %555
      %557 = vadd.xlane.f32.xlu0 %v531
      %v558 = vpop.xlane.xlu0 %557
      %559 = vadd.xlane.f32.xlu0 %v532
      %v560 = vpop.xlane.xlu0 %559
      %561 = vadd.xlane.f32.xlu0 %v533
      %v562 = vpop.xlane.xlu0 %561
      %563 = vadd.xlane.f32.xlu0 %v534
      %v564 = vpop.xlane.xlu0 %563
      %565 = vadd.xlane.f32.xlu0 %v535
      %v566 = vpop.xlane.xlu0 %565
      %567 = vadd.xlane.f32.xlu0 %v536
      %v568 = vpop.xlane.xlu0 %567
      %vm569 = vcmp.ne.s32.totalorder %v439, 0
      %vm570 = vcmp.ne.s32.totalorder %v440, 0
      %vm571 = vcmp.ne.s32.totalorder %v441, 0
      %vm572 = vcmp.ne.s32.totalorder %v442, 0
      %vm573 = vcmp.ne.s32.totalorder %v443, 0
      %vm574 = vcmp.ne.s32.totalorder %v444, 0
      %vm575 = vcmp.ne.s32.totalorder %v445, 0
      %vm576 = vcmp.ne.s32.totalorder %v446, 0
      %vm577 = vcmp.ne.s32.totalorder %v447, 0
      %vm578 = vcmp.ne.s32.totalorder %v448, 0
      %vm579 = vcmp.ne.s32.totalorder %v449, 0
      %vm580 = vcmp.ne.s32.totalorder %v450, 0
      %vm581 = vcmp.ne.s32.totalorder %v451, 0
      %vm582 = vcmp.ne.s32.totalorder %v452, 0
      %vm583 = vcmp.ne.s32.totalorder %v453, 0
      %vm584 = vcmp.ne.s32.totalorder %v454, 0
      %v585 = vsel %vm569, 1, 0
      %v586 = vsel %vm570, 1, 0
      %v587 = vsel %vm571, 1, 0
      %v588 = vsel %vm572, 1, 0
      %v589 = vsel %vm573, 1, 0
      %v590 = vsel %vm574, 1, 0
      %v591 = vsel %vm575, 1, 0
      %v592 = vsel %vm576, 1, 0
      %v593 = vsel %vm577, 1, 0
      %v594 = vsel %vm578, 1, 0
      %v595 = vsel %vm579, 1, 0
      %v596 = vsel %vm580, 1, 0
      %v597 = vsel %vm581, 1, 0
      %v598 = vsel %vm582, 1, 0
      %v599 = vsel %vm583, 1, 0
      %v600 = vsel %vm584, 1, 0
      %v601 = vcvt.s32.f32 %v585
      %v602 = vcvt.s32.f32 %v586
      %v603 = vcvt.s32.f32 %v587
      %v604 = vcvt.s32.f32 %v588
      %v605 = vcvt.s32.f32 %v589
      %v606 = vcvt.s32.f32 %v590
      %v607 = vcvt.s32.f32 %v591
      %v608 = vcvt.s32.f32 %v592
      %v609 = vcvt.s32.f32 %v593
      %v610 = vcvt.s32.f32 %v594
      %v611 = vcvt.s32.f32 %v595
      %v612 = vcvt.s32.f32 %v596
      %v613 = vcvt.s32.f32 %v597
      %v614 = vcvt.s32.f32 %v598
      %v615 = vcvt.s32.f32 %v599
      %v616 = vcvt.s32.f32 %v600
      %v617 = vld [vmem:[%s365] sm:$0x1]
      %v618 = vsub.f32 0.0, %v538
      %v619 = vsub.f32 0.0, %v540
      %v620 = vsub.f32 0.0, %v542
      %v621 = vsub.f32 0.0, %v544
      %v622 = vsub.f32 0.0, %v546
      %v623 = vsub.f32 0.0, %v548
      %v624 = vsub.f32 0.0, %v550
      %v625 = vsub.f32 0.0, %v552
      %v626 = vsub.f32 0.0, %v554
      %v627 = vsub.f32 0.0, %v556
      %v628 = vsub.f32 0.0, %v558
      %v629 = vsub.f32 0.0, %v560
      %v630 = vsub.f32 0.0, %v562
      %v631 = vsub.f32 0.0, %v564
      %v632 = vsub.f32 0.0, %v566
      %v633 = vsub.f32 0.0, %v568
      %v634 = vmul.f32 %v618, %v601
      %v635 = vmul.f32 %v619, %v602
      %v636 = vmul.f32 %v620, %v603
      %v637 = vmul.f32 %v621, %v604
      %v638 = vmul.f32 %v622, %v605
      %v639 = vmul.f32 %v623, %v606
      %v640 = vmul.f32 %v624, %v607
      %v641 = vmul.f32 %v625, %v608
      %v642 = vmul.f32 %v626, %v609
      %v643 = vmul.f32 %v627, %v610
      %v644 = vmul.f32 %v628, %v611
      %v645 = vmul.f32 %v629, %v612
      %v646 = vmul.f32 %v630, %v613
      %v647 = vmul.f32 %v631, %v614
      %v648 = vmul.f32 %v632, %v615
      %v649 = vmul.f32 %v633, %v616
      %vm650 = vcmask 7168
      %v651 = vsel %vm650, %v634, 0.0
      %v652 = vsel %vm650, %v635, 0.0
      %v653 = vadd.f32 %v651, %v652
      %v654 = vsel %vm650, %v636, 0.0
      %v655 = vadd.f32 %v653, %v654
      %v656 = vsel %vm650, %v637, 0.0
      %v657 = vadd.f32 %v655, %v656
      %v658 = vsel %vm650, %v638, 0.0
      %v659 = vadd.f32 %v657, %v658
      %v660 = vsel %vm650, %v639, 0.0
      %v661 = vadd.f32 %v659, %v660
      %v662 = vsel %vm650, %v640, 0.0
      %v663 = vadd.f32 %v661, %v662
      %v664 = vsel %vm650, %v641, 0.0
      %v665 = vadd.f32 %v663, %v664
      %v666 = vsel %vm650, %v642, 0.0
      %v667 = vadd.f32 %v665, %v666
      %v668 = vsel %vm650, %v643, 0.0
      %v669 = vadd.f32 %v667, %v668
      %v670 = vsel %vm650, %v644, 0.0
      %v671 = vadd.f32 %v669, %v670
      %v672 = vsel %vm650, %v645, 0.0
      %v673 = vadd.f32 %v671, %v672
      %v674 = vsel %vm650, %v646, 0.0
      %v675 = vadd.f32 %v673, %v674
      %v676 = vsel %vm650, %v647, 0.0
      %v677 = vadd.f32 %v675, %v676
      %v678 = vsel %vm650, %v648, 0.0
      %v679 = vadd.f32 %v677, %v678
      %v680 = vsel %vm650, %v649, 0.0
      %v681 = vadd.f32 %v679, %v680
      %682 = vadd.xlane.f32.xlu0 %v681
      %v683 = vpop.xlane.xlu0 %682
      %v684 = vrot.slane %v683, 4
      %v685 = vadd.f32 %v683, %v684
      %v686 = vrot.slane %v685, 2
      %v687 = vadd.f32 %v685, %v686
      %v688 = vrot.slane %v687, 1
      %v689 = vadd.f32 %v687, %v688
      %s690 = vtos %v689
      %v691 = vstv %s690
      %v692 = vadd.f32 %v617, %v691
      %vm693 = vcmask 0
      %694 = vst.msk [vmem:[%s365] sm:$0x1] %vm693, %v692
      // Predicated region
      $region37: #{pattern_fix_loss.1} parent=27 // pred_check
        %p695 = pneg %p378
      $region38: #{pattern_fix_loss.1} parent=27 // pred_check_branch
        %697 = sbr.rel (%p695) target = $region40
      $region39: #{pattern_fix_loss.1} parent=27 // pred_region
        %v698 = vld [vmem:[%s370] sm:$0x1]
        %v699 = vsel %vm650, %v601, 0.0
        %v700 = vsel %vm650, %v602, 0.0
        %v701 = vadd.f32 %v699, %v700
        %v702 = vsel %vm650, %v603, 0.0
        %v703 = vadd.f32 %v701, %v702
        %v704 = vsel %vm650, %v604, 0.0
        %v705 = vadd.f32 %v703, %v704
        %v706 = vsel %vm650, %v605, 0.0
        %v707 = vadd.f32 %v705, %v706
        %v708 = vsel %vm650, %v606, 0.0
        %v709 = vadd.f32 %v707, %v708
        %v710 = vsel %vm650, %v607, 0.0
        %v711 = vadd.f32 %v709, %v710
        %v712 = vsel %vm650, %v608, 0.0
        %v713 = vadd.f32 %v711, %v712
        %v714 = vsel %vm650, %v609, 0.0
        %v715 = vadd.f32 %v713, %v714
        %v716 = vsel %vm650, %v610, 0.0
        %v717 = vadd.f32 %v715, %v716
        %v718 = vsel %vm650, %v611, 0.0
        %v719 = vadd.f32 %v717, %v718
        %v720 = vsel %vm650, %v612, 0.0
        %v721 = vadd.f32 %v719, %v720
        %v722 = vsel %vm650, %v613, 0.0
        %v723 = vadd.f32 %v721, %v722
        %v724 = vsel %vm650, %v614, 0.0
        %v725 = vadd.f32 %v723, %v724
        %v726 = vsel %vm650, %v615, 0.0
        %v727 = vadd.f32 %v725, %v726
        %v728 = vsel %vm650, %v616, 0.0
        %v729 = vadd.f32 %v727, %v728
        %730 = vadd.xlane.f32.xlu0 %v729
        %v731 = vpop.xlane.xlu0 %730
        %v732 = vrot.slane %v731, 4
        %v733 = vadd.f32 %v731, %v732
        %v734 = vrot.slane %v733, 2
        %v735 = vadd.f32 %v733, %v734
        %v736 = vrot.slane %v735, 1
        %v737 = vadd.f32 %v735, %v736
        %s738 = vtos %v737
        %v739 = vstv %s738
        %v740 = vadd.f32 %v698, %v739
        %741 = vst.msk [vmem:[%s370] sm:$0x1] %vm693, %v740
      $region40: #{pattern_fix_loss.1} parent=27 // pred_fallthru
        _
      %742 = vmax.xlane.f32.xlu0 %v423
      %v743 = vpop.xlane.xlu0 %742
      %744 = vmax.xlane.f32.xlu0 %v424
      %v745 = vpop.xlane.xlu0 %744
      %746 = vmax.xlane.f32.xlu0 %v425
      %v747 = vpop.xlane.xlu0 %746
      %748 = vmax.xlane.f32.xlu0 %v426
      %v749 = vpop.xlane.xlu0 %748
      %750 = vmax.xlane.f32.xlu0 %v427
      %v751 = vpop.xlane.xlu0 %750
      %752 = vmax.xlane.f32.xlu0 %v428
      %v753 = vpop.xlane.xlu0 %752
      %754 = vmax.xlane.f32.xlu0 %v429
      %v755 = vpop.xlane.xlu0 %754
      %756 = vmax.xlane.f32.xlu0 %v430
      %v757 = vpop.xlane.xlu0 %756
      %758 = vmax.xlane.f32.xlu0 %v431
      %v759 = vpop.xlane.xlu0 %758
      %760 = vmax.xlane.f32.xlu0 %v432
      %v761 = vpop.xlane.xlu0 %760
      %762 = vmax.xlane.f32.xlu0 %v433
      %v763 = vpop.xlane.xlu0 %762
      %764 = vmax.xlane.f32.xlu0 %v434
      %v765 = vpop.xlane.xlu0 %764
      %766 = vmax.xlane.f32.xlu0 %v435
      %v767 = vpop.xlane.xlu0 %766
      %768 = vmax.xlane.f32.xlu0 %v436
      %v769 = vpop.xlane.xlu0 %768
      %770 = vmax.xlane.f32.xlu0 %v437
      %v771 = vpop.xlane.xlu0 %770
      %772 = vmax.xlane.f32.xlu0 %v438
      %v773 = vpop.xlane.xlu0 %772
      %vm774 = vcmp.eq.f32.partialorder %v423, %v743
      %vm775 = vcmp.eq.f32.partialorder %v424, %v745
      %vm776 = vcmp.eq.f32.partialorder %v425, %v747
      %vm777 = vcmp.eq.f32.partialorder %v426, %v749
      %vm778 = vcmp.eq.f32.partialorder %v427, %v751
      %vm779 = vcmp.eq.f32.partialorder %v428, %v753
      %vm780 = vcmp.eq.f32.partialorder %v429, %v755
      %vm781 = vcmp.eq.f32.partialorder %v430, %v757
      %vm782 = vcmp.eq.f32.partialorder %v431, %v759
      %vm783 = vcmp.eq.f32.partialorder %v432, %v761
      %vm784 = vcmp.eq.f32.partialorder %v433, %v763
      %vm785 = vcmp.eq.f32.partialorder %v434, %v765
      %vm786 = vcmp.eq.f32.partialorder %v435, %v767
      %vm787 = vcmp.eq.f32.partialorder %v436, %v769
      %vm788 = vcmp.eq.f32.partialorder %v437, %v771
      %vm789 = vcmp.eq.f32.partialorder %v438, %v773
      %v790 = vsel %vm774, %v456, 128
      %v791 = vsel %vm775, %v456, 128
      %v792 = vsel %vm776, %v456, 128
      %v793 = vsel %vm777, %v456, 128
      %v794 = vsel %vm778, %v456, 128
      %v795 = vsel %vm779, %v456, 128
      %v796 = vsel %vm780, %v456, 128
      %v797 = vsel %vm781, %v456, 128
      %v798 = vsel %vm782, %v456, 128
      %v799 = vsel %vm783, %v456, 128
      %v800 = vsel %vm784, %v456, 128
      %v801 = vsel %vm785, %v456, 128
      %v802 = vsel %vm786, %v456, 128
      %v803 = vsel %vm787, %v456, 128
      %v804 = vsel %vm788, %v456, 128
      %v805 = vsel %vm789, %v456, 128
      %v806 = vand.u32 %v790, 65535
      %v807 = vshra.s32 %v790, 16
      %v808 = vcvt.s32.f32 %v806
      %v809 = vcvt.s32.f32 %v807
      %810 = vmin.xlane.f32.xlu0 %v809
      %v811 = vpop.xlane.xlu0 %810
      %vm812 = vcmp.eq.f32.partialorder %v809, %v811
      %v813 = vsel %vm812, %v808, inf
      %814 = vmin.xlane.f32.xlu0 %v813
      %v815 = vpop.xlane.xlu0 %814
      %v816 = vcvt.f32.s32 %v815
      %v817 = vcvt.f32.s32 %v811
      %v818 = vshll.u32 %v817, 16
      %v819 = vadd.s32 %v818, %v816
      %v820 = vand.u32 %v791, 65535
      %v821 = vshra.s32 %v791, 16
      %v822 = vcvt.s32.f32 %v820
      %v823 = vcvt.s32.f32 %v821
      %824 = vmin.xlane.f32.xlu0 %v823
      %v825 = vpop.xlane.xlu0 %824
      %vm826 = vcmp.eq.f32.partialorder %v823, %v825
      %v827 = vsel %vm826, %v822, inf
      %828 = vmin.xlane.f32.xlu0 %v827
      %v829 = vpop.xlane.xlu0 %828
      %v830 = vcvt.f32.s32 %v829
      %v831 = vcvt.f32.s32 %v825
      %v832 = vshll.u32 %v831, 16
      %v833 = vadd.s32 %v832, %v830
      %v834 = vand.u32 %v792, 65535
      %v835 = vshra.s32 %v792, 16
      %v836 = vcvt.s32.f32 %v834
      %v837 = vcvt.s32.f32 %v835
      %838 = vmin.xlane.f32.xlu0 %v837
      %v839 = vpop.xlane.xlu0 %838
      %vm840 = vcmp.eq.f32.partialorder %v837, %v839
      %v841 = vsel %vm840, %v836, inf
      %842 = vmin.xlane.f32.xlu0 %v841
      %v843 = vpop.xlane.xlu0 %842
      %v844 = vcvt.f32.s32 %v843
      %v845 = vcvt.f32.s32 %v839
      %v846 = vshll.u32 %v845, 16
      %v847 = vadd.s32 %v846, %v844
      %v848 = vand.u32 %v793, 65535
      %v849 = vshra.s32 %v793, 16
      %v850 = vcvt.s32.f32 %v848
      %v851 = vcvt.s32.f32 %v849
      %852 = vmin.xlane.f32.xlu0 %v851
      %v853 = vpop.xlane.xlu0 %852
      %vm854 = vcmp.eq.f32.partialorder %v851, %v853
      %v855 = vsel %vm854, %v850, inf
      %856 = vmin.xlane.f32.xlu0 %v855
      %v857 = vpop.xlane.xlu0 %856
      %v858 = vcvt.f32.s32 %v857
      %v859 = vcvt.f32.s32 %v853
      %v860 = vshll.u32 %v859, 16
      %v861 = vadd.s32 %v860, %v858
      %v862 = vand.u32 %v794, 65535
      %v863 = vshra.s32 %v794, 16
      %v864 = vcvt.s32.f32 %v862
      %v865 = vcvt.s32.f32 %v863
      %866 = vmin.xlane.f32.xlu0 %v865
      %v867 = vpop.xlane.xlu0 %866
      %vm868 = vcmp.eq.f32.partialorder %v865, %v867
      %v869 = vsel %vm868, %v864, inf
      %870 = vmin.xlane.f32.xlu0 %v869
      %v871 = vpop.xlane.xlu0 %870
      %v872 = vcvt.f32.s32 %v871
      %v873 = vcvt.f32.s32 %v867
      %v874 = vshll.u32 %v873, 16
      %v875 = vadd.s32 %v874, %v872
      %v876 = vand.u32 %v795, 65535
      %v877 = vshra.s32 %v795, 16
      %v878 = vcvt.s32.f32 %v876
      %v879 = vcvt.s32.f32 %v877
      %880 = vmin.xlane.f32.xlu0 %v879
      %v881 = vpop.xlane.xlu0 %880
      %vm882 = vcmp.eq.f32.partialorder %v879, %v881
      %v883 = vsel %vm882, %v878, inf
      %884 = vmin.xlane.f32.xlu0 %v883
      %v885 = vpop.xlane.xlu0 %884
      %v886 = vcvt.f32.s32 %v885
      %v887 = vcvt.f32.s32 %v881
      %v888 = vshll.u32 %v887, 16
      %v889 = vadd.s32 %v888, %v886
      %v890 = vand.u32 %v796, 65535
      %v891 = vshra.s32 %v796, 16
      %v892 = vcvt.s32.f32 %v890
      %v893 = vcvt.s32.f32 %v891
      %894 = vmin.xlane.f32.xlu0 %v893
      %v895 = vpop.xlane.xlu0 %894
      %vm896 = vcmp.eq.f32.partialorder %v893, %v895
      %v897 = vsel %vm896, %v892, inf
      %898 = vmin.xlane.f32.xlu0 %v897
      %v899 = vpop.xlane.xlu0 %898
      %v900 = vcvt.f32.s32 %v899
      %v901 = vcvt.f32.s32 %v895
      %v902 = vshll.u32 %v901, 16
      %v903 = vadd.s32 %v902, %v900
      %v904 = vand.u32 %v797, 65535
      %v905 = vshra.s32 %v797, 16
      %v906 = vcvt.s32.f32 %v904
      %v907 = vcvt.s32.f32 %v905
      %908 = vmin.xlane.f32.xlu0 %v907
      %v909 = vpop.xlane.xlu0 %908
      %vm910 = vcmp.eq.f32.partialorder %v907, %v909
      %v911 = vsel %vm910, %v906, inf
      %912 = vmin.xlane.f32.xlu0 %v911
      %v913 = vpop.xlane.xlu0 %912
      %v914 = vcvt.f32.s32 %v913
      %v915 = vcvt.f32.s32 %v909
      %v916 = vshll.u32 %v915, 16
      %v917 = vadd.s32 %v916, %v914
      %v918 = vand.u32 %v798, 65535
      %v919 = vshra.s32 %v798, 16
      %v920 = vcvt.s32.f32 %v918
      %v921 = vcvt.s32.f32 %v919
      %922 = vmin.xlane.f32.xlu0 %v921
      %v923 = vpop.xlane.xlu0 %922
      %vm924 = vcmp.eq.f32.partialorder %v921, %v923
      %v925 = vsel %vm924, %v920, inf
      %926 = vmin.xlane.f32.xlu0 %v925
      %v927 = vpop.xlane.xlu0 %926
      %v928 = vcvt.f32.s32 %v927
      %v929 = vcvt.f32.s32 %v923
      %v930 = vshll.u32 %v929, 16
      %v931 = vadd.s32 %v930, %v928
      %v932 = vand.u32 %v799, 65535
      %v933 = vshra.s32 %v799, 16
      %v934 = vcvt.s32.f32 %v932
      %v935 = vcvt.s32.f32 %v933
      %936 = vmin.xlane.f32.xlu0 %v935
      %v937 = vpop.xlane.xlu0 %936
      %vm938 = vcmp.eq.f32.partialorder %v935, %v937
      %v939 = vsel %vm938, %v934, inf
      %940 = vmin.xlane.f32.xlu0 %v939
      %v941 = vpop.xlane.xlu0 %940
      %v942 = vcvt.f32.s32 %v941
      %v943 = vcvt.f32.s32 %v937
      %v944 = vshll.u32 %v943, 16
      %v945 = vadd.s32 %v944, %v942
      %v946 = vand.u32 %v800, 65535
      %v947 = vshra.s32 %v800, 16
      %v948 = vcvt.s32.f32 %v946
      %v949 = vcvt.s32.f32 %v947
      %950 = vmin.xlane.f32.xlu0 %v949
      %v951 = vpop.xlane.xlu0 %950
      %vm952 = vcmp.eq.f32.partialorder %v949, %v951
      %v953 = vsel %vm952, %v948, inf
      %954 = vmin.xlane.f32.xlu0 %v953
      %v955 = vpop.xlane.xlu0 %954
      %v956 = vcvt.f32.s32 %v955
      %v957 = vcvt.f32.s32 %v951
      %v958 = vshll.u32 %v957, 16
      %v959 = vadd.s32 %v958, %v956
      %v960 = vand.u32 %v801, 65535
      %v961 = vshra.s32 %v801, 16
      %v962 = vcvt.s32.f32 %v960
      %v963 = vcvt.s32.f32 %v961
      %964 = vmin.xlane.f32.xlu0 %v963
      %v965 = vpop.xlane.xlu0 %964
      %vm966 = vcmp.eq.f32.partialorder %v963, %v965
      %v967 = vsel %vm966, %v962, inf
      %968 = vmin.xlane.f32.xlu0 %v967
      %v969 = vpop.xlane.xlu0 %968
      %v970 = vcvt.f32.s32 %v969
      %v971 = vcvt.f32.s32 %v965
      %v972 = vshll.u32 %v971, 16
      %v973 = vadd.s32 %v972, %v970
      %v974 = vand.u32 %v802, 65535
      %v975 = vshra.s32 %v802, 16
      %v976 = vcvt.s32.f32 %v974
      %v977 = vcvt.s32.f32 %v975
      %978 = vmin.xlane.f32.xlu0 %v977
      %v979 = vpop.xlane.xlu0 %978
      %vm980 = vcmp.eq.f32.partialorder %v977, %v979
      %v981 = vsel %vm980, %v976, inf
      %982 = vmin.xlane.f32.xlu0 %v981
      %v983 = vpop.xlane.xlu0 %982
      %v984 = vcvt.f32.s32 %v983
      %v985 = vcvt.f32.s32 %v979
      %v986 = vshll.u32 %v985, 16
      %v987 = vadd.s32 %v986, %v984
      %v988 = vand.u32 %v803, 65535
      %v989 = vshra.s32 %v803, 16
      %v990 = vcvt.s32.f32 %v988
      %v991 = vcvt.s32.f32 %v989
      %992 = vmin.xlane.f32.xlu0 %v991
      %v993 = vpop.xlane.xlu0 %992
      %vm994 = vcmp.eq.f32.partialorder %v991, %v993
      %v995 = vsel %vm994, %v990, inf
      %996 = vmin.xlane.f32.xlu0 %v995
      %v997 = vpop.xlane.xlu0 %996
      %v998 = vcvt.f32.s32 %v997
      %v999 = vcvt.f32.s32 %v993
      %v1000 = vshll.u32 %v999, 16
      %v1001 = vadd.s32 %v1000, %v998
      %v1002 = vand.u32 %v804, 65535
      %v1003 = vshra.s32 %v804, 16
      %v1004 = vcvt.s32.f32 %v1002
      %v1005 = vcvt.s32.f32 %v1003
      %1006 = vmin.xlane.f32.xlu0 %v1005
      %v1007 = vpop.xlane.xlu0 %1006
      %vm1008 = vcmp.eq.f32.partialorder %v1005, %v1007
      %v1009 = vsel %vm1008, %v1004, inf
      %1010 = vmin.xlane.f32.xlu0 %v1009
      %v1011 = vpop.xlane.xlu0 %1010
      %v1012 = vcvt.f32.s32 %v1011
      %v1013 = vcvt.f32.s32 %v1007
      %v1014 = vshll.u32 %v1013, 16
      %v1015 = vadd.s32 %v1014, %v1012
      %v1016 = vand.u32 %v805, 65535
      %v1017 = vshra.s32 %v805, 16
      %v1018 = vcvt.s32.f32 %v1016
      %v1019 = vcvt.s32.f32 %v1017
      %1020 = vmin.xlane.f32.xlu0 %v1019
      %v1021 = vpop.xlane.xlu0 %1020
      %vm1022 = vcmp.eq.f32.partialorder %v1019, %v1021
      %v1023 = vsel %vm1022, %v1018, inf
      %1024 = vmin.xlane.f32.xlu0 %v1023
      %v1025 = vpop.xlane.xlu0 %1024
      %v1026 = vcvt.f32.s32 %v1025
      %v1027 = vcvt.f32.s32 %v1021
      %v1028 = vshll.u32 %v1027, 16
      %v1029 = vadd.s32 %v1028, %v1026
      %v1030 = vld [vmem:[#allocation2] sm:$0xff]
      %v1031 = vld [vmem:[#allocation2 + $0x8] sm:$0xff]
      %v1032 = vld [vmem:[#allocation2 + $0x10] sm:$0xff]
      %v1033 = vld [vmem:[#allocation2 + $0x18] sm:$0xff]
      %v1034 = vld [vmem:[#allocation2 + $0x20] sm:$0xff]
      %v1035 = vld [vmem:[#allocation2 + $0x28] sm:$0xff]
      %v1036 = vld [vmem:[#allocation2 + $0x30] sm:$0xff]
      %v1037 = vld [vmem:[#allocation2 + $0x38] sm:$0xff]
      %v1038 = vld [vmem:[#allocation2 + $0x40] sm:$0xff]
      %v1039 = vld [vmem:[#allocation2 + $0x48] sm:$0xff]
      %v1040 = vld [vmem:[#allocation2 + $0x50] sm:$0xff]
      %v1041 = vld [vmem:[#allocation2 + $0x58] sm:$0xff]
      %v1042 = vld [vmem:[#allocation2 + $0x60] sm:$0xff]
      %v1043 = vld [vmem:[#allocation2 + $0x68] sm:$0xff]
      %v1044 = vld [vmem:[#allocation2 + $0x70] sm:$0xff]
      %v1045 = vld [vmem:[#allocation2 + $0x78] sm:$0xff]
      %vm1046 = vcmp.gt.f32.partialorder %v743, %v1030
      %vm1047 = vcmp.gt.f32.partialorder %v745, %v1031
      %vm1048 = vcmp.gt.f32.partialorder %v747, %v1032
      %vm1049 = vcmp.gt.f32.partialorder %v749, %v1033
      %vm1050 = vcmp.gt.f32.partialorder %v751, %v1034
      %vm1051 = vcmp.gt.f32.partialorder %v753, %v1035
      %vm1052 = vcmp.gt.f32.partialorder %v755, %v1036
      %vm1053 = vcmp.gt.f32.partialorder %v757, %v1037
      %vm1054 = vcmp.gt.f32.partialorder %v759, %v1038
      %vm1055 = vcmp.gt.f32.partialorder %v761, %v1039
      %vm1056 = vcmp.gt.f32.partialorder %v763, %v1040
      %vm1057 = vcmp.gt.f32.partialorder %v765, %v1041
      %vm1058 = vcmp.gt.f32.partialorder %v767, %v1042
      %vm1059 = vcmp.gt.f32.partialorder %v769, %v1043
      %vm1060 = vcmp.gt.f32.partialorder %v771, %v1044
      %vm1061 = vcmp.gt.f32.partialorder %v773, %v1045
      %v1062 = vld [vmem:[#allocation3] sm:$0xff]
      %v1063 = vld [vmem:[#allocation3 + $0x8] sm:$0xff]
      %v1064 = vld [vmem:[#allocation3 + $0x10] sm:$0xff]
      %v1065 = vld [vmem:[#allocation3 + $0x18] sm:$0xff]
      %v1066 = vld [vmem:[#allocation3 + $0x20] sm:$0xff]
      %v1067 = vld [vmem:[#allocation3 + $0x28] sm:$0xff]
      %v1068 = vld [vmem:[#allocation3 + $0x30] sm:$0xff]
      %v1069 = vld [vmem:[#allocation3 + $0x38] sm:$0xff]
      %v1070 = vld [vmem:[#allocation3 + $0x40] sm:$0xff]
      %v1071 = vld [vmem:[#allocation3 + $0x48] sm:$0xff]
      %v1072 = vld [vmem:[#allocation3 + $0x50] sm:$0xff]
      %v1073 = vld [vmem:[#allocation3 + $0x58] sm:$0xff]
      %v1074 = vld [vmem:[#allocation3 + $0x60] sm:$0xff]
      %v1075 = vld [vmem:[#allocation3 + $0x68] sm:$0xff]
      %v1076 = vld [vmem:[#allocation3 + $0x70] sm:$0xff]
      %v1077 = vld [vmem:[#allocation3 + $0x78] sm:$0xff]
      %v1078 = vsel %vm1046, %v819, %v1062
      %v1079 = vsel %vm1047, %v833, %v1063
      %v1080 = vsel %vm1048, %v847, %v1064
      %v1081 = vsel %vm1049, %v861, %v1065
      %v1082 = vsel %vm1050, %v875, %v1066
      %v1083 = vsel %vm1051, %v889, %v1067
      %v1084 = vsel %vm1052, %v903, %v1068
      %v1085 = vsel %vm1053, %v917, %v1069
      %v1086 = vsel %vm1054, %v931, %v1070
      %v1087 = vsel %vm1055, %v945, %v1071
      %v1088 = vsel %vm1056, %v959, %v1072
      %v1089 = vsel %vm1057, %v973, %v1073
      %v1090 = vsel %vm1058, %v987, %v1074
      %v1091 = vsel %vm1059, %v1001, %v1075
      %v1092 = vsel %vm1060, %v1015, %v1076
      %v1093 = vsel %vm1061, %v1029, %v1077
      %1094 = vst.msk [vmem:[#allocation3] sm:$0xff] %vm650, %v1078
      %1095 = vst.msk [vmem:[#allocation3 + $0x8] sm:$0xff] %vm650, %v1079
      %1096 = vst.msk [vmem:[#allocation3 + $0x10] sm:$0xff] %vm650, %v1080
      %1097 = vst.msk [vmem:[#allocation3 + $0x18] sm:$0xff] %vm650, %v1081
      %1098 = vst.msk [vmem:[#allocation3 + $0x20] sm:$0xff] %vm650, %v1082
      %1099 = vst.msk [vmem:[#allocation3 + $0x28] sm:$0xff] %vm650, %v1083
      %1100 = vst.msk [vmem:[#allocation3 + $0x30] sm:$0xff] %vm650, %v1084
      %1101 = vst.msk [vmem:[#allocation3 + $0x38] sm:$0xff] %vm650, %v1085
      %1102 = vst.msk [vmem:[#allocation3 + $0x40] sm:$0xff] %vm650, %v1086
      %1103 = vst.msk [vmem:[#allocation3 + $0x48] sm:$0xff] %vm650, %v1087
      %1104 = vst.msk [vmem:[#allocation3 + $0x50] sm:$0xff] %vm650, %v1088
      %1105 = vst.msk [vmem:[#allocation3 + $0x58] sm:$0xff] %vm650, %v1089
      %1106 = vst.msk [vmem:[#allocation3 + $0x60] sm:$0xff] %vm650, %v1090
      %1107 = vst.msk [vmem:[#allocation3 + $0x68] sm:$0xff] %vm650, %v1091
      %1108 = vst.msk [vmem:[#allocation3 + $0x70] sm:$0xff] %vm650, %v1092
      %1109 = vst.msk [vmem:[#allocation3 + $0x78] sm:$0xff] %vm650, %v1093
      %v1110 = vld [vmem:[#allocation2] sm:$0xff]
      %v1111 = vld [vmem:[#allocation2 + $0x8] sm:$0xff]
      %v1112 = vld [vmem:[#allocation2 + $0x10] sm:$0xff]
      %v1113 = vld [vmem:[#allocation2 + $0x18] sm:$0xff]
      %v1114 = vld [vmem:[#allocation2 + $0x20] sm:$0xff]
      %v1115 = vld [vmem:[#allocation2 + $0x28] sm:$0xff]
      %v1116 = vld [vmem:[#allocation2 + $0x30] sm:$0xff]
      %v1117 = vld [vmem:[#allocation2 + $0x38] sm:$0xff]
      %v1118 = vld [vmem:[#allocation2 + $0x40] sm:$0xff]
      %v1119 = vld [vmem:[#allocation2 + $0x48] sm:$0xff]
      %v1120 = vld [vmem:[#allocation2 + $0x50] sm:$0xff]
      %v1121 = vld [vmem:[#allocation2 + $0x58] sm:$0xff]
      %v1122 = vld [vmem:[#allocation2 + $0x60] sm:$0xff]
      %v1123 = vld [vmem:[#allocation2 + $0x68] sm:$0xff]
      %v1124 = vld [vmem:[#allocation2 + $0x70] sm:$0xff]
      %v1125 = vld [vmem:[#allocation2 + $0x78] sm:$0xff]
      %v1126 = vmax.f32 %v1110, %v743
      %v1127 = vmax.f32 %v1111, %v745
      %v1128 = vmax.f32 %v1112, %v747
      %v1129 = vmax.f32 %v1113, %v749
      %v1130 = vmax.f32 %v1114, %v751
      %v1131 = vmax.f32 %v1115, %v753
      %v1132 = vmax.f32 %v1116, %v755
      %v1133 = vmax.f32 %v1117, %v757
      %v1134 = vmax.f32 %v1118, %v759
      %v1135 = vmax.f32 %v1119, %v761
      %v1136 = vmax.f32 %v1120, %v763
      %v1137 = vmax.f32 %v1121, %v765
      %v1138 = vmax.f32 %v1122, %v767
      %v1139 = vmax.f32 %v1123, %v769
      %v1140 = vmax.f32 %v1124, %v771
      %v1141 = vmax.f32 %v1125, %v773
      %1142 = vst.msk [vmem:[#allocation2] sm:$0xff] %vm650, %v1126
      %1143 = vst.msk [vmem:[#allocation2 + $0x8] sm:$0xff] %vm650, %v1127
      %1144 = vst.msk [vmem:[#allocation2 + $0x10] sm:$0xff] %vm650, %v1128
      %1145 = vst.msk [vmem:[#allocation2 + $0x18] sm:$0xff] %vm650, %v1129
      %1146 = vst.msk [vmem:[#allocation2 + $0x20] sm:$0xff] %vm650, %v1130
      %1147 = vst.msk [vmem:[#allocation2 + $0x28] sm:$0xff] %vm650, %v1131
      %1148 = vst.msk [vmem:[#allocation2 + $0x30] sm:$0xff] %vm650, %v1132
      %1149 = vst.msk [vmem:[#allocation2 + $0x38] sm:$0xff] %vm650, %v1133
      %1150 = vst.msk [vmem:[#allocation2 + $0x40] sm:$0xff] %vm650, %v1134
      %1151 = vst.msk [vmem:[#allocation2 + $0x48] sm:$0xff] %vm650, %v1135
      %1152 = vst.msk [vmem:[#allocation2 + $0x50] sm:$0xff] %vm650, %v1136
      %1153 = vst.msk [vmem:[#allocation2 + $0x58] sm:$0xff] %vm650, %v1137
      %1154 = vst.msk [vmem:[#allocation2 + $0x60] sm:$0xff] %vm650, %v1138
      %1155 = vst.msk [vmem:[#allocation2 + $0x68] sm:$0xff] %vm650, %v1139
      %1156 = vst.msk [vmem:[#allocation2 + $0x70] sm:$0xff] %vm650, %v1140
      %1157 = vst.msk [vmem:[#allocation2 + $0x78] sm:$0xff] %vm650, %v1141
      // Predicated region
      $region41: #{pattern_fix_loss.1} parent=27 // pred_check
        %p1158 = pneg %p378
      $region42: #{pattern_fix_loss.1} parent=27 // pred_check_branch
        %1160 = sbr.rel (%p1158) target = $region44
      $region43: #{pattern_fix_loss.1} parent=27 // pred_region
        %v1161 = vld [vmem:[#allocation3] sm:$0xff]
        %v1162 = vld [vmem:[#allocation3 + $0x8] sm:$0xff]
        %v1163 = vld [vmem:[#allocation3 + $0x10] sm:$0xff]
        %v1164 = vld [vmem:[#allocation3 + $0x18] sm:$0xff]
        %v1165 = vld [vmem:[#allocation3 + $0x20] sm:$0xff]
        %v1166 = vld [vmem:[#allocation3 + $0x28] sm:$0xff]
        %v1167 = vld [vmem:[#allocation3 + $0x30] sm:$0xff]
        %v1168 = vld [vmem:[#allocation3 + $0x38] sm:$0xff]
        %v1169 = vld [vmem:[#allocation3 + $0x40] sm:$0xff]
        %v1170 = vld [vmem:[#allocation3 + $0x48] sm:$0xff]
        %v1171 = vld [vmem:[#allocation3 + $0x50] sm:$0xff]
        %v1172 = vld [vmem:[#allocation3 + $0x58] sm:$0xff]
        %v1173 = vld [vmem:[#allocation3 + $0x60] sm:$0xff]
        %v1174 = vld [vmem:[#allocation3 + $0x68] sm:$0xff]
        %v1175 = vld [vmem:[#allocation3 + $0x70] sm:$0xff]
        %v1176 = vld [vmem:[#allocation3 + $0x78] sm:$0xff]
        %1177 = vset.pattern.permute.xlu0 0
        %1178 = vperm.xlu0 %1177, %v1161
        %v1179 = vpop.permute.xlu0 %1178
        %1180 = vset.pattern.permute.xlu0 0
        %1181 = vperm.xlu0 %1180, %v1162
        %v1182 = vpop.permute.xlu0 %1181
        %1183 = vset.pattern.permute.xlu0 0
        %1184 = vperm.xlu0 %1183, %v1163
        %v1185 = vpop.permute.xlu0 %1184
        %1186 = vset.pattern.permute.xlu0 0
        %1187 = vperm.xlu0 %1186, %v1164
        %v1188 = vpop.permute.xlu0 %1187
        %1189 = vset.pattern.permute.xlu0 0
        %1190 = vperm.xlu0 %1189, %v1165
        %v1191 = vpop.permute.xlu0 %1190
        %1192 = vset.pattern.permute.xlu0 0
        %1193 = vperm.xlu0 %1192, %v1166
        %v1194 = vpop.permute.xlu0 %1193
        %1195 = vset.pattern.permute.xlu0 0
        %1196 = vperm.xlu0 %1195, %v1167
        %v1197 = vpop.permute.xlu0 %1196
        %1198 = vset.pattern.permute.xlu0 0
        %1199 = vperm.xlu0 %1198, %v1168
        %v1200 = vpop.permute.xlu0 %1199
        %1201 = vset.pattern.permute.xlu0 0
        %1202 = vperm.xlu0 %1201, %v1169
        %v1203 = vpop.permute.xlu0 %1202
        %1204 = vset.pattern.permute.xlu0 0
        %1205 = vperm.xlu0 %1204, %v1170
        %v1206 = vpop.permute.xlu0 %1205
        %1207 = vset.pattern.permute.xlu0 0
        %1208 = vperm.xlu0 %1207, %v1171
        %v1209 = vpop.permute.xlu0 %1208
        %1210 = vset.pattern.permute.xlu0 0
        %1211 = vperm.xlu0 %1210, %v1172
        %v1212 = vpop.permute.xlu0 %1211
        %1213 = vset.pattern.permute.xlu0 0
        %1214 = vperm.xlu0 %1213, %v1173
        %v1215 = vpop.permute.xlu0 %1214
        %1216 = vset.pattern.permute.xlu0 0
        %1217 = vperm.xlu0 %1216, %v1174
        %v1218 = vpop.permute.xlu0 %1217
        %1219 = vset.pattern.permute.xlu0 0
        %1220 = vperm.xlu0 %1219, %v1175
        %v1221 = vpop.permute.xlu0 %1220
        %1222 = vset.pattern.permute.xlu0 0
        %1223 = vperm.xlu0 %1222, %v1176
        %v1224 = vpop.permute.xlu0 %1223
        %v1225 = vperm.slane %v1179, %v456
        %v1226 = vadd.s32 %v456, 4294967288
        %v1227 = vperm.slane %v1182, %v1226
        %vm1228 = vcmask 130112
        %v1229 = vsel %vm1228, %v1227, %v1225
        %v1230 = vadd.s32 %v456, 4294967280
        %v1231 = vperm.slane %v1185, %v1230
        %vm1232 = vcmask 195712
        %v1233 = vsel %vm1232, %v1231, %v1229
        %v1234 = vadd.s32 %v456, 4294967272
        %v1235 = vperm.slane %v1188, %v1234
        %vm1236 = vcmask 261312
        %v1237 = vsel %vm1236, %v1235, %v1233
        %v1238 = vadd.s32 %v456, 4294967264
        %v1239 = vperm.slane %v1191, %v1238
        %vm1240 = vcmask 326912
        %v1241 = vsel %vm1240, %v1239, %v1237
        %v1242 = vadd.s32 %v456, 4294967256
        %v1243 = vperm.slane %v1194, %v1242
        %vm1244 = vcmask 392512
        %v1245 = vsel %vm1244, %v1243, %v1241
        %v1246 = vadd.s32 %v456, 4294967248
        %v1247 = vperm.slane %v1197, %v1246
        %vm1248 = vcmask 458112
        %v1249 = vsel %vm1248, %v1247, %v1245
        %v1250 = vadd.s32 %v456, 4294967240
        %v1251 = vperm.slane %v1200, %v1250
        %vm1252 = vcmask 523712
        %v1253 = vsel %vm1252, %v1251, %v1249
        %v1254 = vadd.s32 %v456, 4294967232
        %v1255 = vperm.slane %v1203, %v1254
        %vm1256 = vcmask 589312
        %v1257 = vsel %vm1256, %v1255, %v1253
        %v1258 = vadd.s32 %v456, 4294967224
        %v1259 = vperm.slane %v1206, %v1258
        %vm1260 = vcmask 654912
        %v1261 = vsel %vm1260, %v1259, %v1257
        %v1262 = vadd.s32 %v456, 4294967216
        %v1263 = vperm.slane %v1209, %v1262
        %vm1264 = vcmask 720512
        %v1265 = vsel %vm1264, %v1263, %v1261
        %v1266 = vadd.s32 %v456, 4294967208
        %v1267 = vperm.slane %v1212, %v1266
        %vm1268 = vcmask 786112
        %v1269 = vsel %vm1268, %v1267, %v1265
        %v1270 = vadd.s32 %v456, 4294967200
        %v1271 = vperm.slane %v1215, %v1270
        %vm1272 = vcmask 851712
        %v1273 = vsel %vm1272, %v1271, %v1269
        %v1274 = vadd.s32 %v456, 4294967192
        %v1275 = vperm.slane %v1218, %v1274
        %vm1276 = vcmask 917312
        %v1277 = vsel %vm1276, %v1275, %v1273
        %v1278 = vadd.s32 %v456, 4294967184
        %v1279 = vperm.slane %v1221, %v1278
        %vm1280 = vcmask 982912
        %v1281 = vsel %vm1280, %v1279, %v1277
        %v1282 = vadd.s32 %v456, 4294967176
        %v1283 = vperm.slane %v1224, %v1282
        %vm1284 = vcmask 1048512
        %v1285 = vsel %vm1284, %v1283, %v1281
        %1286 = vst [vmem:[%s360] sm:$0x1] %v1285
        %vm1287 = vcmp.eq.s32.totalorder %v439, 2
        %vm1288 = vcmp.eq.s32.totalorder %v440, 2
        %vm1289 = vcmp.eq.s32.totalorder %v441, 2
        %vm1290 = vcmp.eq.s32.totalorder %v442, 2
        %vm1291 = vcmp.eq.s32.totalorder %v443, 2
        %vm1292 = vcmp.eq.s32.totalorder %v444, 2
        %vm1293 = vcmp.eq.s32.totalorder %v445, 2
        %vm1294 = vcmp.eq.s32.totalorder %v446, 2
        %vm1295 = vcmp.eq.s32.totalorder %v447, 2
        %vm1296 = vcmp.eq.s32.totalorder %v448, 2
        %vm1297 = vcmp.eq.s32.totalorder %v449, 2
        %vm1298 = vcmp.eq.s32.totalorder %v450, 2
        %vm1299 = vcmp.eq.s32.totalorder %v451, 2
        %vm1300 = vcmp.eq.s32.totalorder %v452, 2
        %vm1301 = vcmp.eq.s32.totalorder %v453, 2
        %vm1302 = vcmp.eq.s32.totalorder %v454, 2
        %v1303 = vsel %vm1287, 1, 0
        %v1304 = vsel %vm1288, 1, 0
        %v1305 = vsel %vm1289, 1, 0
        %v1306 = vsel %vm1290, 1, 0
        %v1307 = vsel %vm1291, 1, 0
        %v1308 = vsel %vm1292, 1, 0
        %v1309 = vsel %vm1293, 1, 0
        %v1310 = vsel %vm1294, 1, 0
        %v1311 = vsel %vm1295, 1, 0
        %v1312 = vsel %vm1296, 1, 0
        %v1313 = vsel %vm1297, 1, 0
        %v1314 = vsel %vm1298, 1, 0
        %v1315 = vsel %vm1299, 1, 0
        %v1316 = vsel %vm1300, 1, 0
        %v1317 = vsel %vm1301, 1, 0
        %v1318 = vsel %vm1302, 1, 0
        %v1319 = vcvt.s32.f32 %v1303
        %v1320 = vcvt.s32.f32 %v1304
        %v1321 = vcvt.s32.f32 %v1305
        %v1322 = vcvt.s32.f32 %v1306
        %v1323 = vcvt.s32.f32 %v1307
        %v1324 = vcvt.s32.f32 %v1308
        %v1325 = vcvt.s32.f32 %v1309
        %v1326 = vcvt.s32.f32 %v1310
        %v1327 = vcvt.s32.f32 %v1311
        %v1328 = vcvt.s32.f32 %v1312
        %v1329 = vcvt.s32.f32 %v1313
        %v1330 = vcvt.s32.f32 %v1314
        %v1331 = vcvt.s32.f32 %v1315
        %v1332 = vcvt.s32.f32 %v1316
        %v1333 = vcvt.s32.f32 %v1317
        %v1334 = vcvt.s32.f32 %v1318
        %v1335 = vld [vmem:[%s375] sm:$0x1]
        %v1336 = vmul.f32 %v423, 1.442695
        %v1337 = vpow.pop %v1336
        %v1338 = vmul.f32 %v424, 1.442695
        %v1339 = vpow.pop %v1338
        %v1340 = vmul.f32 %v425, 1.442695
        %v1341 = vpow.pop %v1340
        %v1342 = vmul.f32 %v426, 1.442695
        %v1343 = vpow.pop %v1342
        %v1344 = vmul.f32 %v427, 1.442695
        %v1345 = vpow.pop %v1344
        %v1346 = vmul.f32 %v428, 1.442695
        %v1347 = vpow.pop %v1346
        %v1348 = vmul.f32 %v429, 1.442695
        %v1349 = vpow.pop %v1348
        %v1350 = vmul.f32 %v430, 1.442695
        %v1351 = vpow.pop %v1350
        %v1352 = vmul.f32 %v431, 1.442695
        %v1353 = vpow.pop %v1352
        %v1354 = vmul.f32 %v432, 1.442695
        %v1355 = vpow.pop %v1354
        %v1356 = vmul.f32 %v433, 1.442695
        %v1357 = vpow.pop %v1356
        %v1358 = vmul.f32 %v434, 1.442695
        %v1359 = vpow.pop %v1358
        %v1360 = vmul.f32 %v435, 1.442695
        %v1361 = vpow.pop %v1360
        %v1362 = vmul.f32 %v436, 1.442695
        %v1363 = vpow.pop %v1362
        %v1364 = vmul.f32 %v437, 1.442695
        %v1365 = vpow.pop %v1364
        %v1366 = vmul.f32 %v438, 1.442695
        %v1367 = vpow.pop %v1366
        %v1368 = vadd.f32 %v1337, 1e-08
        %v1369 = vadd.f32 %v1339, 1e-08
        %v1370 = vadd.f32 %v1341, 1e-08
        %v1371 = vadd.f32 %v1343, 1e-08
        %v1372 = vadd.f32 %v1345, 1e-08
        %v1373 = vadd.f32 %v1347, 1e-08
        %v1374 = vadd.f32 %v1349, 1e-08
        %v1375 = vadd.f32 %v1351, 1e-08
        %v1376 = vadd.f32 %v1353, 1e-08
        %v1377 = vadd.f32 %v1355, 1e-08
        %v1378 = vadd.f32 %v1357, 1e-08
        %v1379 = vadd.f32 %v1359, 1e-08
        %v1380 = vadd.f32 %v1361, 1e-08
        %v1381 = vadd.f32 %v1363, 1e-08
        %v1382 = vadd.f32 %v1365, 1e-08
        %v1383 = vadd.f32 %v1367, 1e-08
        %v1384 = vlog2.pop %v1368
        %v1385 = vmul.f32 %v1384, 0.6931472
        %v1386 = vlog2.pop %v1369
        %v1387 = vmul.f32 %v1386, 0.6931472
        %v1388 = vlog2.pop %v1370
        %v1389 = vmul.f32 %v1388, 0.6931472
        %v1390 = vlog2.pop %v1371
        %v1391 = vmul.f32 %v1390, 0.6931472
        %v1392 = vlog2.pop %v1372
        %v1393 = vmul.f32 %v1392, 0.6931472
        %v1394 = vlog2.pop %v1373
        %v1395 = vmul.f32 %v1394, 0.6931472
        %v1396 = vlog2.pop %v1374
        %v1397 = vmul.f32 %v1396, 0.6931472
        %v1398 = vlog2.pop %v1375
        %v1399 = vmul.f32 %v1398, 0.6931472
        %v1400 = vlog2.pop %v1376
        %v1401 = vmul.f32 %v1400, 0.6931472
        %v1402 = vlog2.pop %v1377
        %v1403 = vmul.f32 %v1402, 0.6931472
        %v1404 = vlog2.pop %v1378
        %v1405 = vmul.f32 %v1404, 0.6931472
        %v1406 = vlog2.pop %v1379
        %v1407 = vmul.f32 %v1406, 0.6931472
        %v1408 = vlog2.pop %v1380
        %v1409 = vmul.f32 %v1408, 0.6931472
        %v1410 = vlog2.pop %v1381
        %v1411 = vmul.f32 %v1410, 0.6931472
        %v1412 = vlog2.pop %v1382
        %v1413 = vmul.f32 %v1412, 0.6931472
        %v1414 = vlog2.pop %v1383
        %v1415 = vmul.f32 %v1414, 0.6931472
        %1432 = vrot.lane.b32.xlu0 %v1385, 126
        %v1433 = vpop.permute.xlu0 %1432
        %1434 = vrot.lane.b32.xlu0 %v1387, 126
        %v1435 = vpop.permute.xlu0 %1434
        %1436 = vrot.lane.b32.xlu0 %v1389, 126
        %v1437 = vpop.permute.xlu0 %1436
        %1438 = vrot.lane.b32.xlu0 %v1391, 126
        %v1439 = vpop.permute.xlu0 %1438
        %1440 = vrot.lane.b32.xlu0 %v1393, 126
        %v1441 = vpop.permute.xlu0 %1440
        %1442 = vrot.lane.b32.xlu0 %v1395, 126
        %v1443 = vpop.permute.xlu0 %1442
        %1444 = vrot.lane.b32.xlu0 %v1397, 126
        %v1445 = vpop.permute.xlu0 %1444
        %1446 = vrot.lane.b32.xlu0 %v1399, 126
        %v1447 = vpop.permute.xlu0 %1446
        %1448 = vrot.lane.b32.xlu0 %v1401, 126
        %v1449 = vpop.permute.xlu0 %1448
        %1450 = vrot.lane.b32.xlu0 %v1403, 126
        %v1451 = vpop.permute.xlu0 %1450
        %1452 = vrot.lane.b32.xlu0 %v1405, 126
        %v1453 = vpop.permute.xlu0 %1452
        %1454 = vrot.lane.b32.xlu0 %v1407, 126
        %v1455 = vpop.permute.xlu0 %1454
        %1456 = vrot.lane.b32.xlu0 %v1409, 126
        %v1457 = vpop.permute.xlu0 %1456
        %1458 = vrot.lane.b32.xlu0 %v1411, 126
        %v1459 = vpop.permute.xlu0 %1458
        %1460 = vrot.lane.b32.xlu0 %v1413, 126
        %v1461 = vpop.permute.xlu0 %1460
        %1462 = vrot.lane.b32.xlu0 %v1415, 126
        %v1463 = vpop.permute.xlu0 %1462
        %v1480 = vmul.f32 %v1319, %v1433
        %v1481 = vmul.f32 %v1320, %v1435
        %v1482 = vmul.f32 %v1321, %v1437
        %v1483 = vmul.f32 %v1322, %v1439
        %v1484 = vmul.f32 %v1323, %v1441
        %v1485 = vmul.f32 %v1324, %v1443
        %v1486 = vmul.f32 %v1325, %v1445
        %v1487 = vmul.f32 %v1326, %v1447
        %v1488 = vmul.f32 %v1327, %v1449
        %v1489 = vmul.f32 %v1328, %v1451
        %v1490 = vmul.f32 %v1329, %v1453
        %v1491 = vmul.f32 %v1330, %v1455
        %v1492 = vmul.f32 %v1331, %v1457
        %v1493 = vmul.f32 %v1332, %v1459
        %v1494 = vmul.f32 %v1333, %v1461
        %v1495 = vmul.f32 %v1334, %v1463
        %v1496 = vsel %vm650, %v1480, 0.0
        %v1497 = vsel %vm650, %v1481, 0.0
        %v1498 = vadd.f32 %v1496, %v1497
        %v1499 = vsel %vm650, %v1482, 0.0
        %v1500 = vadd.f32 %v1498, %v1499
        %v1501 = vsel %vm650, %v1483, 0.0
        %v1502 = vadd.f32 %v1500, %v1501
        %v1503 = vsel %vm650, %v1484, 0.0
        %v1504 = vadd.f32 %v1502, %v1503
        %v1505 = vsel %vm650, %v1485, 0.0
        %v1506 = vadd.f32 %v1504, %v1505
        %v1507 = vsel %vm650, %v1486, 0.0
        %v1508 = vadd.f32 %v1506, %v1507
        %v1509 = vsel %vm650, %v1487, 0.0
        %v1510 = vadd.f32 %v1508, %v1509
        %v1511 = vsel %vm650, %v1488, 0.0
        %v1512 = vadd.f32 %v1510, %v1511
        %v1513 = vsel %vm650, %v1489, 0.0
        %v1514 = vadd.f32 %v1512, %v1513
        %v1515 = vsel %vm650, %v1490, 0.0
        %v1516 = vadd.f32 %v1514, %v1515
        %v1517 = vsel %vm650, %v1491, 0.0
        %v1518 = vadd.f32 %v1516, %v1517
        %v1519 = vsel %vm650, %v1492, 0.0
        %v1520 = vadd.f32 %v1518, %v1519
        %v1521 = vsel %vm650, %v1493, 0.0
        %v1522 = vadd.f32 %v1520, %v1521
        %v1523 = vsel %vm650, %v1494, 0.0
        %v1524 = vadd.f32 %v1522, %v1523
        %v1525 = vsel %vm650, %v1495, 0.0
        %v1526 = vadd.f32 %v1524, %v1525
        %1527 = vadd.xlane.f32.xlu0 %v1526
        %v1528 = vpop.xlane.xlu0 %1527
        %v1529 = vrot.slane %v1528, 4
        %v1530 = vadd.f32 %v1528, %v1529
        %v1531 = vrot.slane %v1530, 2
        %v1532 = vadd.f32 %v1530, %v1531
        %v1533 = vrot.slane %v1532, 1
        %v1534 = vadd.f32 %v1532, %v1533
        %s1535 = vtos %v1534
        %v1536 = vstv %s1535
        %v1537 = vadd.f32 %v1335, %v1536
        %1538 = vst.msk [vmem:[%s375] sm:$0x1] %vm693, %v1537
      $region44: #{pattern_fix_loss.1} parent=27 // pred_fallthru
        _
      %s1539 = sadd.s32 %s24, %s25
      %p1540 = scmp.lt.s32.totalorder %s23, 1
      %s1541 = scalar_select %p1540, %s23, 1
      %p1542 = scmp.lt.s32.totalorder %s1539, 0
      %s1543 = scalar_select %p1542, %s1539, 0
      %s1544 = sadd.s32 %s1543, %s1541
      %s1545 = scalar_lea.vmem %s2, %s1544
      %s1546 = sadd.s32 %s23, %s24
      %p1547 = scmp.lt.s32.totalorder %s1546, 1
      %s1548 = scalar_select %p1547, %s1546, 1
      %s1549 = scalar_lea.vmem %s3, %s1548
      %s1550 = sadd.s32 %s23, %s24
      %p1551 = scmp.lt.s32.totalorder %s1550, 1
      %s1552 = scalar_select %p1551, %s1550, 1
      %s1553 = scalar_lea.vmem %s4, %s1552
      %s1554 = sadd.s32 %s23, %s24
      %p1555 = scmp.lt.s32.totalorder %s1554, 1
      %s1556 = scalar_select %p1555, %s1554, 1
      %s1557 = scalar_lea.vmem %s5, %s1556
      // Predicated region
      $region45: #{pattern_fix_loss.1} parent=27 // pred_check
        %p1558 = pneg %p127
      $region46: #{pattern_fix_loss.1} parent=27 // pred_check_branch
        %1560 = sbr.rel (%p1558) target = $region48
      $region47: #{pattern_fix_loss.1} parent=27 // pred_region
        %s1561 = sadd.s32 %s24, %s25
      $region48: #{pattern_fix_loss.1} parent=27 // pred_fallthru
        _
      // Predicated region
      $region49: #{pattern_fix_loss.1} parent=27 // pred_check
        %p1562 = pneg %p155
      $region50: #{pattern_fix_loss.1} parent=27 // pred_check_branch
        %1564 = sbr.rel (%p1562) target = $region52
      $region51: #{pattern_fix_loss.1} parent=27 // pred_region
        %s1565 = sadd.s32 %s23, %s24
      $region52: #{pattern_fix_loss.1} parent=27 // pred_fallthru
        _
      // Predicated region
      $region53: #{pattern_fix_loss.1} parent=27 // pred_check
        %p1566 = pneg %p183
      $region54: #{pattern_fix_loss.1} parent=27 // pred_check_branch
        %1568 = sbr.rel (%p1566) target = $region56
      $region55: #{pattern_fix_loss.1} parent=27 // pred_region
        %s1569 = sadd.s32 %s23, %s24
      $region56: #{pattern_fix_loss.1} parent=27 // pred_fallthru
        _
      // Predicated region
      $region57: #{pattern_fix_loss.1} parent=27 // pred_check
        %p1570 = pneg %p211
      $region58: #{pattern_fix_loss.1} parent=27 // pred_check_branch
        %1572 = sbr.rel (%p1570) target = $region60
      $region59: #{pattern_fix_loss.1} parent=27 // pred_region
        %s1573 = sadd.s32 %s23, %s24
      $region60: #{pattern_fix_loss.1} parent=27 // pred_fallthru
        _
    $region28: #{pattern_fix_loss.1} parent=5 // pred_fallthru
      _
    %p1574 = scmp.le.s32.totalorder 2, %s12
    // Predicated region
    $region61: #{pattern_fix_loss.1} parent=5 // pred_check
      %p1575 = pneg %p1574
    $region62: #{pattern_fix_loss.1} parent=5 // pred_check_branch
      %1577 = sbr.rel (%p1575) target = $region64
    $region63: #{pattern_fix_loss.1} parent=5 // pred_region
      %s1578 = ssub.s32 %s12, 2
      // Predicated region
      $region65: #{pattern_fix_loss.1} parent=63 // pred_check
        %p1579 = pneg %p133
      $region66: #{pattern_fix_loss.1} parent=63 // pred_check_branch
        %1581 = sbr.rel (%p1579) target = $region68
      $region67: #{pattern_fix_loss.1} parent=63 // pred_region
        %s1582 = sadd.s32 %s28, %s29
        %p1583 = scmp.lt.s32.totalorder %s27, 1
        %s1584 = scalar_select %p1583, %s27, 1
        %p1585 = scmp.lt.s32.totalorder %s1582, 0
        %s1586 = scalar_select %p1585, %s1582, 0
        %s1587 = sadd.s32 %s1586, %s1584
        %s1588 = scalar_lea.vmem %s2, %s1587
      $region68: #{pattern_fix_loss.1} parent=63 // pred_fallthru
        _
      // Predicated region
      $region69: #{pattern_fix_loss.1} parent=63 // pred_check
        %p1589 = pneg %p161
      $region70: #{pattern_fix_loss.1} parent=63 // pred_check_branch
        %1591 = sbr.rel (%p1589) target = $region72
      $region71: #{pattern_fix_loss.1} parent=63 // pred_region
        %s1592 = sadd.s32 %s27, %s28
        %p1593 = scmp.lt.s32.totalorder %s1592, 1
        %s1594 = scalar_select %p1593, %s1592, 1
        %s1595 = scalar_lea.vmem %s3, %s1594
      $region72: #{pattern_fix_loss.1} parent=63 // pred_fallthru
        _
      // Predicated region
      $region73: #{pattern_fix_loss.1} parent=63 // pred_check
        %p1596 = pneg %p189
      $region74: #{pattern_fix_loss.1} parent=63 // pred_check_branch
        %1598 = sbr.rel (%p1596) target = $region76
      $region75: #{pattern_fix_loss.1} parent=63 // pred_region
        %s1599 = sadd.s32 %s27, %s28
        %p1600 = scmp.lt.s32.totalorder %s1599, 1
        %s1601 = scalar_select %p1600, %s1599, 1
        %s1602 = scalar_lea.vmem %s4, %s1601
      $region76: #{pattern_fix_loss.1} parent=63 // pred_fallthru
        _
      // Predicated region
      $region77: #{pattern_fix_loss.1} parent=63 // pred_check
        %p1603 = pneg %p217
      $region78: #{pattern_fix_loss.1} parent=63 // pred_check_branch
        %1605 = sbr.rel (%p1603) target = $region80
      $region79: #{pattern_fix_loss.1} parent=63 // pred_region
        %s1606 = sadd.s32 %s27, %s28
        %p1607 = scmp.lt.s32.totalorder %s1606, 1
        %s1608 = scalar_select %p1607, %s1606, 1
        %s1609 = scalar_lea.vmem %s5, %s1608
      $region80: #{pattern_fix_loss.1} parent=63 // pred_fallthru
        _
    $region64: #{pattern_fix_loss.1} parent=5 // pred_fallthru
      _
  $region6: #{pattern_fix_loss.1} parent=0 // loop_footer
    %s16 = sadd.s32 1, %s12
  $region7: #{pattern_fix_loss.1} parent=0 // loop_footer_branch
    %11 = sbr.rel target = $region3
  $region8: #{pattern_fix_loss.1} parent=0 // loop_exit
    _

</llo_original>
